<compile_context>
chip_gen: v7x
topology: tpu7x:2x2x1
jax: 0.10.0
libtpu: 0.0.40
codegen_flags: <defaults>
</compile_context>

<pallas_src>
import jax
import jax.numpy as jnp
import numpy as np
from jax.experimental import pallas as pl
from jax.experimental.pallas import tpu as pltpu


def prebottleneck_kernel(
    x_ref,        # (NB, H, W, Cin)        f32
    pcin_ref,     # (2, Cin)               f32   rows: bn1_scale, bn1_bias
    pcb_ref,      # (7, Cb)                f32   rows: b1, bn2_s, bn2_b, b2, bse2_b, bn3_s, bn3_b
    bse1_ref,     # (1, Cse)               f32
    bout_ref,     # (1, Cout)              f32   b3 + bd folded
    w1_ref,       # (Cin, Cb)              bf16  conv1 1x1
    w2_ref,       # (9, Cb)                f32   depthwise 3x3 taps (ky*3+kx, c)
    wse1_ref,     # (Cb, Cse)              f32
    wse2_ref,     # (Cse, Cb)              f32
    w3_ref,       # (Cb, Cout)             bf16  conv3 1x1
    wd_ref,       # (Cin, Cout)            bf16  conv1x1 shortcut
    out_ref,      # (NB, H, W, Cout)       f32
    dw_ref,       # scratch (NB, H+2, W+2, Cb) f32  zero-padded depthwise input
):
    NB, H, W, Cin = x_ref.shape
    Cb = w1_ref.shape[1]
    Cout = w3_ref.shape[1]
    M = NB * H * W

    # ---- norm1 (folded BN) + ReLU -------------------------------------------------
    bn1_s = pcin_ref[0:1, :]
    bn1_b = pcin_ref[1:2, :]
    x = x_ref[...].reshape(M, Cin)
    h1 = jnp.maximum(x * bn1_s + bn1_b, 0.0)                       # (M, Cin) f32
    h1_bf = h1.astype(jnp.bfloat16)                                # reused by shortcut

    # ---- conv1 (1x1, MXU bf16) -> norm2 + ReLU ------------------------------------
    y1 = jnp.dot(h1_bf, w1_ref[...], preferred_element_type=jnp.float32) + pcb_ref[0:1, :]
    h2 = jnp.maximum(y1 * pcb_ref[1:2, :] + pcb_ref[2:3, :], 0.0)  # (M, Cb) f32

    # ---- conv2: depthwise 3x3, stride 1, zero pad 1 -------------------------------
    # Zero-padded VMEM scratch; the 9 taps are static Ref windows (no materialized copies).
    dw_ref[...] = jnp.zeros_like(dw_ref)
    dw_ref[:, 1:H + 1, 1:W + 1, :] = h2.reshape(NB, H, W, Cb)
    w2 = w2_ref[...]                                               # (9, Cb)
    acc = dw_ref[:, 0:H, 0:W, :] * w2[0:1, :].reshape(1, 1, 1, Cb)
    for k in range(1, 9):
        ky, kx = k // 3, k % 3
        acc = acc + dw_ref[:, ky:ky + H, kx:kx + W, :] * w2[k:k + 1, :].reshape(1, 1, 1, Cb)
    c2 = (acc + pcb_ref[3:4, :].reshape(1, 1, 1, Cb)).reshape(NB, H * W, Cb)

    # ---- SE block (per-image global avg pool -> fc1 -> relu -> fc2 -> sigmoid) ----
    s = jnp.mean(c2, axis=1)                                       # (NB, Cb)
    s = jnp.maximum(
        jnp.dot(s, wse1_ref[...], preferred_element_type=jnp.float32) + bse1_ref[...], 0.0)
    s = jnp.dot(s, wse2_ref[...], preferred_element_type=jnp.float32) + pcb_ref[4:5, :]
    gate = jax.nn.sigmoid(s).reshape(NB, 1, Cb)

    # ---- norm3 + ReLU (fused with the SE gate) ------------------------------------
    h3 = jnp.maximum(c2 * gate * pcb_ref[5:6, :].reshape(1, 1, Cb)
                     + pcb_ref[6:7, :].reshape(1, 1, Cb), 0.0)
    h3_bf = h3.reshape(M, Cb).astype(jnp.bfloat16)

    # ---- conv3 (1x1) + shortcut conv1x1 + residual add ----------------------------
    y3 = jnp.dot(h3_bf, w3_ref[...], preferred_element_type=jnp.float32)
    sc = jnp.dot(h1_bf, wd_ref[...], preferred_element_type=jnp.float32)   # deferred shortcut
    out = y3 + sc + bout_ref[...]
    out_ref[...] = out.reshape(NB, H, W, Cout).astype(out_ref.dtype)


def _const_spec(a):
    zeros = (0,) * a.ndim
    return pl.BlockSpec(a.shape, lambda i, _z=zeros: _z)


def _choose_batch_block(N, H, W, Cin, Cb, Cout, act_budget_bytes=8 << 20):
    # Rough f32 working set per image; keep the per-step activation footprint modest so the
    # kernel also fits v7x's 64 MiB VMEM at larger shapes.
    per_img = H * W * (Cin + 4 * Cb + 2 * Cout) * 4
    nb = max(1, min(N, act_budget_bytes // max(per_img, 1)))
    while N % nb:          # keep the grid exact (no partial batch blocks)
        nb -= 1
    return nb


def prebottleneck_forward(x_nhwc, p):
    """x_nhwc: (N, H, W, Cin) float32. Returns (N, H, W, Cout) float32."""
    N, H, W, Cin = x_nhwc.shape
    Cb = p["w1"].shape[1]
    Cse = p["wse1"].shape[1]
    Cout = p["w3"].shape[1]

    NB = _choose_batch_block(N, H, W, Cin, Cb, Cout)
    grid = (N // NB,)

    # Pack small per-channel vectors -> fewer tiny DMA descriptors.
    pcin = jnp.concatenate([p["bn1_s"], p["bn1_b"]], axis=0)                      # (2, Cin)
    pcb = jnp.concatenate([p["b1"], p["bn2_s"], p["bn2_b"], p["b2"],
                           p["bse2"], p["bn3_s"], p["bn3_b"]], axis=0)            # (7, Cb)
    bout = p["b3"] + p["bd"]                                                      # (1, Cout)
    w1 = p["w1"].astype(jnp.bfloat16)
    w3 = p["w3"].astype(jnp.bfloat16)
    wd = p["wd"].astype(jnp.bfloat16)

    args = (x_nhwc, pcin, pcb, p["bse1"], bout,
            w1, p["w2"], p["wse1"], p["wse2"], w3, wd)

    in_specs = [pl.BlockSpec((NB, H, W, Cin), lambda i: (i, 0, 0, 0))]
    in_specs += [_const_spec(a) for a in args[1:]]

    # Advisory cost estimate for XLA's scheduling of surrounding ops.
    flops = (2 * N * H * W * (Cin * Cb + Cb * Cout + Cin * Cout)   # conv1, conv3, shortcut
             + 2 * N * H * W * Cb * 9                              # depthwise 3x3
             + 4 * N * Cb * Cse                                    # SE fc1/fc2
             + 12 * N * H * W * Cb)                                # BN/ReLU/gate elementwise
    bytes_accessed = (x_nhwc.size * x_nhwc.dtype.itemsize
                      + N * H * W * Cout * 4
                      + sum(int(a.size) * a.dtype.itemsize for a in args[1:]))

    # Explicit VMEM budget: double-buffered in/out blocks + intermediates + padded dw scratch.
    def rup(v, m):
        return -(-v // m) * m
    blk_bytes = NB * H * rup(W, 8) * (rup(Cin, 128) + rup(Cout, 128)) * 4
    scratch_bytes = NB * (H + 2) * rup(W + 2, 8) * rup(Cb, 128) * 4
    interm_bytes = 6 * NB * H * rup(W, 8) * rup(Cb, 128) * 4
    vmem_need = 2 * blk_bytes + scratch_bytes + interm_bytes + (2 << 20)
    vmem_limit = int(min(max(2 * vmem_need, 32 << 20), 48 << 20))

    return pl.pallas_call(
        prebottleneck_kernel,
        out_shape=jax.ShapeDtypeStruct((N, H, W, Cout), jnp.float32),
        grid_spec=pltpu.PrefetchScalarGridSpec(
            num_scalar_prefetch=0,
            grid=grid,
            in_specs=in_specs,
            out_specs=pl.BlockSpec((NB, H, W, Cout), lambda i: (i, 0, 0, 0)),
            scratch_shapes=[pltpu.VMEM((NB, H + 2, W + 2, Cb), jnp.float32)],
        ),
        compiler_params=pltpu.CompilerParams(
            dimension_semantics=("parallel",),      # batch blocks are independent (v7x megacore)
            vmem_limit_bytes=vmem_limit,
        ),
        cost_estimate=pl.CostEstimate(
            flops=int(flops),
            transcendentals=int(N * Cb),
            bytes_accessed=int(bytes_accessed),
        ),
    )(*args)


# ------------------------- pure-JAX reference (independent check) -------------------
def ref_forward(x_nhwc, p, matmul_dtype=jnp.float32):
    """matmul_dtype=jnp.bfloat16 mirrors the kernel's MXU precision (f32 accumulation)."""
    def bn_relu(x, s, b):
        return jnp.maximum(x * s.reshape(1, 1, 1, -1) + b.reshape(1, 1, 1, -1), 0.0)

    def conv1x1(x, w, b, dt=jnp.float32):
        prec = "highest" if dt == jnp.float32 else None
        y = jnp.einsum("nhwc,cd->nhwd", x.astype(dt), w.astype(dt),
                       precision=prec, preferred_element_type=jnp.float32)
        return y + b.reshape(1, 1, 1, -1)

    Cb = p["w1"].shape[1]
    h1 = bn_relu(x_nhwc, p["bn1_s"], p["bn1_b"])
    sc = conv1x1(h1, p["wd"], p["bd"], matmul_dtype)
    y = conv1x1(h1, p["w1"], p["b1"], matmul_dtype)
    y = bn_relu(y, p["bn2_s"], p["bn2_b"])
    w_dw = p["w2"].reshape(3, 3, Cb)[:, :, None, :]                 # HWIO, I=1 per group
    y = jax.lax.conv_general_dilated(
        y, w_dw, window_strides=(1, 1), padding=((1, 1), (1, 1)),
        dimension_numbers=("NHWC", "HWIO", "NHWC"),
        feature_group_count=Cb, precision="highest")
    y = y + p["b2"].reshape(1, 1, 1, -1)
    s = jnp.mean(y, axis=(1, 2), keepdims=True)
    s = jnp.maximum(conv1x1(s, p["wse1"], p["bse1"]), 0.0)
    s = conv1x1(s, p["wse2"], p["bse2"])
    y = y * jax.nn.sigmoid(s)
    y = bn_relu(y, p["bn3_s"], p["bn3_b"])
    y = conv1x1(y, p["w3"], p["b3"], matmul_dtype)
    return y + sc


# ------------------------------ deterministic params --------------------------------
def _fold_bn(key, C, eps=1e-5):
    k1, k2, k3, k4 = jax.random.split(key, 4)
    gamma = 1.0 + 0.1 * jax.random.normal(k1, (C,), jnp.float32)
    beta = 0.1 * jax.random.normal(k2, (C,), jnp.float32)
    mean = 0.1 * jax.random.normal(k3, (C,), jnp.float32)
    var = 1.0 + 0.1 * jax.random.uniform(k4, (C,), jnp.float32)
    scale = gamma / jnp.sqrt(var + eps)
    bias = beta - mean * scale
    return scale.reshape(1, C), bias.reshape(1, C)


def make_params(key, in_chs, out_chs, bottleneck_chs, se_chs):
    ks = jax.random.split(key, 16)
    p = {}
    p["bn1_s"], p["bn1_b"] = _fold_bn(ks[0], in_chs)
    p["w1"] = 0.1 * jax.random.normal(ks[1], (in_chs, bottleneck_chs), jnp.float32)
    p["b1"] = 0.05 * jax.random.normal(ks[2], (1, bottleneck_chs), jnp.float32)
    p["bn2_s"], p["bn2_b"] = _fold_bn(ks[3], bottleneck_chs)
    p["w2"] = 0.1 * jax.random.normal(ks[4], (9, bottleneck_chs), jnp.float32)   # 3x3 depthwise
    p["b2"] = 0.05 * jax.random.normal(ks[5], (1, bottleneck_chs), jnp.float32)
    p["wse1"] = 0.1 * jax.random.normal(ks[6], (bottleneck_chs, se_chs), jnp.float32)
    p["bse1"] = 0.05 * jax.random.normal(ks[7], (1, se_chs), jnp.float32)
    p["wse2"] = 0.1 * jax.random.normal(ks[8], (se_chs, bottleneck_chs), jnp.float32)
    p["bse2"] = 0.05 * jax.random.normal(ks[9], (1, bottleneck_chs), jnp.float32)
    p["bn3_s"], p["bn3_b"] = _fold_bn(ks[10], bottleneck_chs)
    p["w3"] = 0.1 * jax.random.normal(ks[11], (bottleneck_chs, out_chs), jnp.float32)
    p["b3"] = 0.05 * jax.random.normal(ks[12], (1, out_chs), jnp.float32)
    p["wd"] = 0.1 * jax.random.normal(ks[13], (in_chs, out_chs), jnp.float32)    # shortcut conv1x1
    p["bd"] = 0.05 * jax.random.normal(ks[14], (1, out_chs), jnp.float32)
    return p


if __name__ == "__main__":
    # Module config (defaults): stride=1, bottle_ratio=1, group_size=1, se_ratio=0.25,
    # downsample='conv1x1'. in_chs != out_chs so the conv1x1 shortcut path is exercised.
    N, H, W = 2, 8, 8
    in_chs, out_chs = 32, 64
    bottleneck_chs = int(round(out_chs * 1.0))            # 64 (group_size=1 -> depthwise conv2)
    se_chs = int(round(in_chs * 0.25))                    # 8

    key = jax.random.PRNGKey(0)
    kp, kx = jax.random.split(key)
    params = make_params(kp, in_chs, out_chs, bottleneck_chs, se_chs)

    # PyTorch-convention NCHW input, transposed to NHWC for the kernel.
    x_nchw = jax.random.normal(kx, (N, in_chs, H, W), jnp.float32)
    x_nhwc = jnp.transpose(x_nchw, (0, 2, 3, 1))

    out = jax.block_until_ready(prebottleneck_forward(x_nhwc, params))
    assert out.shape == (N, H, W, out_chs)

    # (1) precision-matched reference (bf16 MXU inputs, f32 accumulation): tight tolerance.
    ref_bf16 = jax.block_until_ready(ref_forward(x_nhwc, params, jnp.bfloat16))
    np.testing.assert_allclose(np.asarray(out), np.asarray(ref_bf16), atol=2e-3, rtol=2e-3)

    # (2) full-f32 reference: tolerance loosened to bf16 matmul-input rounding level.
    ref_f32 = jax.block_until_ready(ref_forward(x_nhwc, params, jnp.float32))
    np.testing.assert_allclose(np.asarray(out), np.asarray(ref_f32), atol=5e-2, rtol=5e-2)

    print("KERNEL_OK")
</pallas_src>

<mosaic_0001>
module attributes {stable_mosaic.version = 11 : i64} {
  func.func @prebottleneck_kernel(%arg0: i32, %arg1: memref<2x8x8x32xf32, #tpu.memory_space<vmem>>, %arg2: memref<2x32xf32, #tpu.memory_space<vmem>>, %arg3: memref<7x64xf32, #tpu.memory_space<vmem>>, %arg4: memref<1x8xf32, #tpu.memory_space<vmem>>, %arg5: memref<1x64xf32, #tpu.memory_space<vmem>>, %arg6: memref<32x64xbf16, #tpu.memory_space<vmem>>, %arg7: memref<9x64xf32, #tpu.memory_space<vmem>>, %arg8: memref<64x8xf32, #tpu.memory_space<vmem>>, %arg9: memref<8x64xf32, #tpu.memory_space<vmem>>, %arg10: memref<64x64xbf16, #tpu.memory_space<vmem>>, %arg11: memref<32x64xbf16, #tpu.memory_space<vmem>>, %arg12: memref<2x8x8x64xf32, #tpu.memory_space<vmem>>, %arg13: memref<2x10x10x64xf32, #tpu.memory_space<vmem>>) attributes {dimension_semantics = [#tpu.dimension_semantics<parallel>], iteration_bounds = array<i64: 1>, scalar_prefetch = 0 : i64, scratch_operands = 1 : i64, tpu.core_type = #tpu.core_type<tc>, window_params = [{transform_indices = @transform_0, window_bounds = array<i64: 2, 8, 8, 32>}, {pipeline_mode = #tpu.pipeline_mode<synchronous>, transform_indices = @transform_1, window_bounds = array<i64: 2, 32>}, {pipeline_mode = #tpu.pipeline_mode<synchronous>, transform_indices = @transform_2, window_bounds = array<i64: 7, 64>}, {pipeline_mode = #tpu.pipeline_mode<synchronous>, transform_indices = @transform_3, window_bounds = array<i64: 1, 8>}, {pipeline_mode = #tpu.pipeline_mode<synchronous>, transform_indices = @transform_4, window_bounds = array<i64: 1, 64>}, {pipeline_mode = #tpu.pipeline_mode<synchronous>, transform_indices = @transform_5, window_bounds = array<i64: 32, 64>}, {pipeline_mode = #tpu.pipeline_mode<synchronous>, transform_indices = @transform_6, window_bounds = array<i64: 9, 64>}, {pipeline_mode = #tpu.pipeline_mode<synchronous>, transform_indices = @transform_7, window_bounds = array<i64: 64, 8>}, {pipeline_mode = #tpu.pipeline_mode<synchronous>, transform_indices = @transform_8, window_bounds = array<i64: 8, 64>}, {pipeline_mode = #tpu.pipeline_mode<synchronous>, transform_indices = @transform_9, window_bounds = array<i64: 64, 64>}, {pipeline_mode = #tpu.pipeline_mode<synchronous>, transform_indices = @transform_10, window_bounds = array<i64: 32, 64>}, {transform_indices = @transform_11, window_bounds = array<i64: 2, 8, 8, 64>}]} {
    %c0 = arith.constant 0 : index
    %c0_0 = arith.constant 0 : index
    %0 = vector.load %arg2[%c0, %c0_0] : memref<2x32xf32, #tpu.memory_space<vmem>>, vector<1x32xf32>
    %c1 = arith.constant 1 : index
    %c0_1 = arith.constant 0 : index
    %1 = vector.load %arg2[%c1, %c0_1] : memref<2x32xf32, #tpu.memory_space<vmem>>, vector<1x32xf32>
    %c0_2 = arith.constant 0 : index
    %c0_3 = arith.constant 0 : index
    %c0_4 = arith.constant 0 : index
    %c0_5 = arith.constant 0 : index
    %2 = vector.load %arg1[%c0_2, %c0_3, %c0_4, %c0_5] : memref<2x8x8x32xf32, #tpu.memory_space<vmem>>, vector<2x8x8x32xf32>
    %3 = vector.shape_cast %2 : vector<2x8x8x32xf32> to vector<128x32xf32>
    %4 = vector.broadcast %0 : vector<1x32xf32> to vector<128x32xf32>
    %5 = arith.mulf %3, %4 : vector<128x32xf32>
    %6 = vector.broadcast %1 : vector<1x32xf32> to vector<128x32xf32>
    %7 = arith.addf %5, %6 : vector<128x32xf32>
    %cst = arith.constant 0.000000e+00 : f32
    %8 = vector.broadcast %cst : f32 to vector<128x32xf32>
    %9 = arith.maximumf %7, %8 : vector<128x32xf32>
    %10 = arith.truncf %9 : vector<128x32xf32> to vector<128x32xbf16>
    %c0_6 = arith.constant 0 : index
    %c0_7 = arith.constant 0 : index
    %11 = vector.load %arg6[%c0_6, %c0_7] : memref<32x64xbf16, #tpu.memory_space<vmem>>, vector<32x64xbf16>
    %cst_8 = arith.constant dense<0.000000e+00> : vector<128x64xf32>
    %12 = tpu.matmul %10, %11, %cst_8 {dimension_numbers = #tpu.dot_dimension_numbers<[1], [0], [0], [1], [0, 0, 1, 1], [], []>} : vector<128x32xbf16>, vector<32x64xbf16>, vector<128x64xf32> -> vector<128x64xf32>
    %c0_9 = arith.constant 0 : index
    %c0_10 = arith.constant 0 : index
    %13 = vector.load %arg3[%c0_9, %c0_10] : memref<7x64xf32, #tpu.memory_space<vmem>>, vector<1x64xf32>
    %14 = vector.broadcast %13 : vector<1x64xf32> to vector<128x64xf32>
    %15 = arith.addf %12, %14 : vector<128x64xf32>
    %c1_11 = arith.constant 1 : index
    %c0_12 = arith.constant 0 : index
    %16 = vector.load %arg3[%c1_11, %c0_12] : memref<7x64xf32, #tpu.memory_space<vmem>>, vector<1x64xf32>
    %17 = vector.broadcast %16 : vector<1x64xf32> to vector<128x64xf32>
    %18 = arith.mulf %15, %17 : vector<128x64xf32>
    %c2 = arith.constant 2 : index
    %c0_13 = arith.constant 0 : index
    %19 = vector.load %arg3[%c2, %c0_13] : memref<7x64xf32, #tpu.memory_space<vmem>>, vector<1x64xf32>
    %20 = vector.broadcast %19 : vector<1x64xf32> to vector<128x64xf32>
    %21 = arith.addf %18, %20 : vector<128x64xf32>
    %cst_14 = arith.constant 0.000000e+00 : f32
    %22 = vector.broadcast %cst_14 : f32 to vector<128x64xf32>
    %23 = arith.maximumf %21, %22 : vector<128x64xf32>
    %cst_15 = arith.constant 0.000000e+00 : f32
    %24 = vector.broadcast %cst_15 : f32 to vector<2x10x10x64xf32>
    %c0_16 = arith.constant 0 : index
    %c0_17 = arith.constant 0 : index
    %c0_18 = arith.constant 0 : index
    %c0_19 = arith.constant 0 : index
    %25 = vector.load %arg13[%c0_16, %c0_17, %c0_18, %c0_19] : memref<2x10x10x64xf32, #tpu.memory_space<vmem>>, vector<2x10x10x64xf32>
    tpu.vector_store %arg13[%c0_16, %c0_17, %c0_18, %c0_19], %24 {strides = array<i32>} : memref<2x10x10x64xf32, #tpu.memory_space<vmem>>, vector<2x10x10x64xf32>,
    %26 = vector.shape_cast %23 : vector<128x64xf32> to vector<2x8x8x64xf32>
    %c0_20 = arith.constant 0 : index
    %c1_21 = arith.constant 1 : index
    %c1_22 = arith.constant 1 : index
    %c0_23 = arith.constant 0 : index
    %27 = vector.load %arg13[%c0_20, %c1_21, %c1_22, %c0_23] : memref<2x10x10x64xf32, #tpu.memory_space<vmem>>, vector<2x8x8x64xf32>
    tpu.vector_store %arg13[%c0_20, %c1_21, %c1_22, %c0_23], %26 {strides = array<i32>} : memref<2x10x10x64xf32, #tpu.memory_space<vmem>>, vector<2x8x8x64xf32>,
    %c0_24 = arith.constant 0 : index
    %c0_25 = arith.constant 0 : index
    %28 = vector.load %arg7[%c0_24, %c0_25] : memref<9x64xf32, #tpu.memory_space<vmem>>, vector<9x64xf32>
    %c0_26 = arith.constant 0 : index
    %c0_27 = arith.constant 0 : index
    %c0_28 = arith.constant 0 : index
    %c0_29 = arith.constant 0 : index
    %29 = vector.load %arg13[%c0_26, %c0_27, %c0_28, %c0_29] : memref<2x10x10x64xf32, #tpu.memory_space<vmem>>, vector<2x8x8x64xf32>
    %30 = vector.extract_strided_slice %28 {offsets = [0, 0], sizes = [1, 64], strides = [1, 1]} : vector<9x64xf32> to vector<1x64xf32>
    %31 = vector.shape_cast %30 : vector<1x64xf32> to vector<1x1x1x64xf32>
    %32 = vector.broadcast %31 : vector<1x1x1x64xf32> to vector<2x8x8x64xf32>
    %33 = arith.mulf %29, %32 : vector<2x8x8x64xf32>
    %c0_30 = arith.constant 0 : index
    %c0_31 = arith.constant 0 : index
    %c1_32 = arith.constant 1 : index
    %c0_33 = arith.constant 0 : index
    %34 = vector.load %arg13[%c0_30, %c0_31, %c1_32, %c0_33] : memref<2x10x10x64xf32, #tpu.memory_space<vmem>>, vector<2x8x8x64xf32>
    %35 = vector.extract_strided_slice %28 {offsets = [1, 0], sizes = [1, 64], strides = [1, 1]} : vector<9x64xf32> to vector<1x64xf32>
    %36 = vector.shape_cast %35 : vector<1x64xf32> to vector<1x1x1x64xf32>
    %37 = vector.broadcast %36 : vector<1x1x1x64xf32> to vector<2x8x8x64xf32>
    %38 = arith.mulf %34, %37 : vector<2x8x8x64xf32>
    %39 = arith.addf %33, %38 : vector<2x8x8x64xf32>
    %c0_34 = arith.constant 0 : index
    %c0_35 = arith.constant 0 : index
    %c2_36 = arith.constant 2 : index
    %c0_37 = arith.constant 0 : index
    %40 = vector.load %arg13[%c0_34, %c0_35, %c2_36, %c0_37] : memref<2x10x10x64xf32, #tpu.memory_space<vmem>>, vector<2x8x8x64xf32>
    %41 = vector.extract_strided_slice %28 {offsets = [2, 0], sizes = [1, 64], strides = [1, 1]} : vector<9x64xf32> to vector<1x64xf32>
    %42 = vector.shape_cast %41 : vector<1x64xf32> to vector<1x1x1x64xf32>
    %43 = vector.broadcast %42 : vector<1x1x1x64xf32> to vector<2x8x8x64xf32>
    %44 = arith.mulf %40, %43 : vector<2x8x8x64xf32>
    %45 = arith.addf %39, %44 : vector<2x8x8x64xf32>
    %c0_38 = arith.constant 0 : index
    %c1_39 = arith.constant 1 : index
    %c0_40 = arith.constant 0 : index
    %c0_41 = arith.constant 0 : index
    %46 = vector.load %arg13[%c0_38, %c1_39, %c0_40, %c0_41] : memref<2x10x10x64xf32, #tpu.memory_space<vmem>>, vector<2x8x8x64xf32>
    %47 = vector.extract_strided_slice %28 {offsets = [3, 0], sizes = [1, 64], strides = [1, 1]} : vector<9x64xf32> to vector<1x64xf32>
    %48 = vector.shape_cast %47 : vector<1x64xf32> to vector<1x1x1x64xf32>
    %49 = vector.broadcast %48 : vector<1x1x1x64xf32> to vector<2x8x8x64xf32>
    %50 = arith.mulf %46, %49 : vector<2x8x8x64xf32>
    %51 = arith.addf %45, %50 : vector<2x8x8x64xf32>
    %c0_42 = arith.constant 0 : index
    %c1_43 = arith.constant 1 : index
    %c1_44 = arith.constant 1 : index
    %c0_45 = arith.constant 0 : index
    %52 = vector.load %arg13[%c0_42, %c1_43, %c1_44, %c0_45] : memref<2x10x10x64xf32, #tpu.memory_space<vmem>>, vector<2x8x8x64xf32>
    %53 = vector.extract_strided_slice %28 {offsets = [4, 0], sizes = [1, 64], strides = [1, 1]} : vector<9x64xf32> to vector<1x64xf32>
    %54 = vector.shape_cast %53 : vector<1x64xf32> to vector<1x1x1x64xf32>
    %55 = vector.broadcast %54 : vector<1x1x1x64xf32> to vector<2x8x8x64xf32>
    %56 = arith.mulf %52, %55 : vector<2x8x8x64xf32>
    %57 = arith.addf %51, %56 : vector<2x8x8x64xf32>
    %c0_46 = arith.constant 0 : index
    %c1_47 = arith.constant 1 : index
    %c2_48 = arith.constant 2 : index
    %c0_49 = arith.constant 0 : index
    %58 = vector.load %arg13[%c0_46, %c1_47, %c2_48, %c0_49] : memref<2x10x10x64xf32, #tpu.memory_space<vmem>>, vector<2x8x8x64xf32>
    %59 = vector.extract_strided_slice %28 {offsets = [5, 0], sizes = [1, 64], strides = [1, 1]} : vector<9x64xf32> to vector<1x64xf32>
    %60 = vector.shape_cast %59 : vector<1x64xf32> to vector<1x1x1x64xf32>
    %61 = vector.broadcast %60 : vector<1x1x1x64xf32> to vector<2x8x8x64xf32>
    %62 = arith.mulf %58, %61 : vector<2x8x8x64xf32>
    %63 = arith.addf %57, %62 : vector<2x8x8x64xf32>
    %c0_50 = arith.constant 0 : index
    %c2_51 = arith.constant 2 : index
    %c0_52 = arith.constant 0 : index
    %c0_53 = arith.constant 0 : index
    %64 = vector.load %arg13[%c0_50, %c2_51, %c0_52, %c0_53] : memref<2x10x10x64xf32, #tpu.memory_space<vmem>>, vector<2x8x8x64xf32>
    %65 = vector.extract_strided_slice %28 {offsets = [6, 0], sizes = [1, 64], strides = [1, 1]} : vector<9x64xf32> to vector<1x64xf32>
    %66 = vector.shape_cast %65 : vector<1x64xf32> to vector<1x1x1x64xf32>
    %67 = vector.broadcast %66 : vector<1x1x1x64xf32> to vector<2x8x8x64xf32>
    %68 = arith.mulf %64, %67 : vector<2x8x8x64xf32>
    %69 = arith.addf %63, %68 : vector<2x8x8x64xf32>
    %c0_54 = arith.constant 0 : index
    %c2_55 = arith.constant 2 : index
    %c1_56 = arith.constant 1 : index
    %c0_57 = arith.constant 0 : index
    %70 = vector.load %arg13[%c0_54, %c2_55, %c1_56, %c0_57] : memref<2x10x10x64xf32, #tpu.memory_space<vmem>>, vector<2x8x8x64xf32>
    %71 = vector.extract_strided_slice %28 {offsets = [7, 0], sizes = [1, 64], strides = [1, 1]} : vector<9x64xf32> to vector<1x64xf32>
    %72 = vector.shape_cast %71 : vector<1x64xf32> to vector<1x1x1x64xf32>
    %73 = vector.broadcast %72 : vector<1x1x1x64xf32> to vector<2x8x8x64xf32>
    %74 = arith.mulf %70, %73 : vector<2x8x8x64xf32>
    %75 = arith.addf %69, %74 : vector<2x8x8x64xf32>
    %c0_58 = arith.constant 0 : index
    %c2_59 = arith.constant 2 : index
    %c2_60 = arith.constant 2 : index
    %c0_61 = arith.constant 0 : index
    %76 = vector.load %arg13[%c0_58, %c2_59, %c2_60, %c0_61] : memref<2x10x10x64xf32, #tpu.memory_space<vmem>>, vector<2x8x8x64xf32>
    %77 = vector.extract_strided_slice %28 {offsets = [8, 0], sizes = [1, 64], strides = [1, 1]} : vector<9x64xf32> to vector<1x64xf32>
    %78 = vector.shape_cast %77 : vector<1x64xf32> to vector<1x1x1x64xf32>
    %79 = vector.broadcast %78 : vector<1x1x1x64xf32> to vector<2x8x8x64xf32>
    %80 = arith.mulf %76, %79 : vector<2x8x8x64xf32>
    %81 = arith.addf %75, %80 : vector<2x8x8x64xf32>
    %c3 = arith.constant 3 : index
    %c0_62 = arith.constant 0 : index
    %82 = vector.load %arg3[%c3, %c0_62] : memref<7x64xf32, #tpu.memory_space<vmem>>, vector<1x64xf32>
    %83 = vector.shape_cast %82 : vector<1x64xf32> to vector<1x1x1x64xf32>
    %84 = vector.broadcast %83 : vector<1x1x1x64xf32> to vector<2x8x8x64xf32>
    %85 = arith.addf %81, %84 : vector<2x8x8x64xf32>
    %86 = vector.shape_cast %85 : vector<2x8x8x64xf32> to vector<2x64x64xf32>
    %cst_63 = arith.constant dense<0.000000e+00> : vector<2x64xf32>
    %87 = vector.multi_reduction <add>, %86, %cst_63 [1] : vector<2x64x64xf32> to vector<2x64xf32>
    %cst_64 = arith.constant 6.400000e+01 : f32
    %88 = vector.broadcast %cst_64 : f32 to vector<2x64xf32>
    %89 = arith.divf %87, %88 : vector<2x64xf32>
    %c0_65 = arith.constant 0 : index
    %c0_66 = arith.constant 0 : index
    %90 = vector.load %arg8[%c0_65, %c0_66] : memref<64x8xf32, #tpu.memory_space<vmem>>, vector<64x8xf32>
    %cst_67 = arith.constant dense<0.000000e+00> : vector<2x8xf32>
    %91 = tpu.matmul %89, %90, %cst_67 {dimension_numbers = #tpu.dot_dimension_numbers<[1], [0], [0], [1], [0, 0, 1, 1], [], []>} : vector<2x64xf32>, vector<64x8xf32>, vector<2x8xf32> -> vector<2x8xf32>
    %c0_68 = arith.constant 0 : index
    %c0_69 = arith.constant 0 : index
    %92 = vector.load %arg4[%c0_68, %c0_69] : memref<1x8xf32, #tpu.memory_space<vmem>>, vector<1x8xf32>
    %93 = vector.broadcast %92 : vector<1x8xf32> to vector<2x8xf32>
    %94 = arith.addf %91, %93 : vector<2x8xf32>
    %cst_70 = arith.constant 0.000000e+00 : f32
    %95 = vector.broadcast %cst_70 : f32 to vector<2x8xf32>
    %96 = arith.maximumf %94, %95 : vector<2x8xf32>
    %c0_71 = arith.constant 0 : index
    %c0_72 = arith.constant 0 : index
    %97 = vector.load %arg9[%c0_71, %c0_72] : memref<8x64xf32, #tpu.memory_space<vmem>>, vector<8x64xf32>
    %cst_73 = arith.constant dense<0.000000e+00> : vector<2x64xf32>
    %98 = tpu.matmul %96, %97, %cst_73 {dimension_numbers = #tpu.dot_dimension_numbers<[1], [0], [0], [1], [0, 0, 1, 1], [], []>} : vector<2x8xf32>, vector<8x64xf32>, vector<2x64xf32> -> vector<2x64xf32>
    %c4 = arith.constant 4 : index
    %c0_74 = arith.constant 0 : index
    %99 = vector.load %arg3[%c4, %c0_74] : memref<7x64xf32, #tpu.memory_space<vmem>>, vector<1x64xf32>
    %100 = vector.broadcast %99 : vector<1x64xf32> to vector<2x64xf32>
    %101 = arith.addf %98, %100 : vector<2x64xf32>
    %102 = arith.negf %101 : vector<2x64xf32>
    %103 = math.exp %102 : vector<2x64xf32>
    %cst_75 = arith.constant 1.000000e+00 : f32
    %104 = vector.broadcast %cst_75 : f32 to vector<2x64xf32>
    %105 = arith.addf %104, %103 : vector<2x64xf32>
    %106 = arith.divf %104, %105 : vector<2x64xf32>
    %107 = vector.shape_cast %106 : vector<2x64xf32> to vector<2x1x64xf32>
    %108 = vector.broadcast %107 : vector<2x1x64xf32> to vector<2x64x64xf32>
    %109 = arith.mulf %86, %108 : vector<2x64x64xf32>
    %c5 = arith.constant 5 : index
    %c0_76 = arith.constant 0 : index
    %110 = vector.load %arg3[%c5, %c0_76] : memref<7x64xf32, #tpu.memory_space<vmem>>, vector<1x64xf32>
    %111 = vector.shape_cast %110 : vector<1x64xf32> to vector<1x1x64xf32>
    %112 = vector.broadcast %111 : vector<1x1x64xf32> to vector<2x64x64xf32>
    %113 = arith.mulf %109, %112 : vector<2x64x64xf32>
    %c6 = arith.constant 6 : index
    %c0_77 = arith.constant 0 : index
    %114 = vector.load %arg3[%c6, %c0_77] : memref<7x64xf32, #tpu.memory_space<vmem>>, vector<1x64xf32>
    %115 = vector.shape_cast %114 : vector<1x64xf32> to vector<1x1x64xf32>
    %116 = vector.broadcast %115 : vector<1x1x64xf32> to vector<2x64x64xf32>
    %117 = arith.addf %113, %116 : vector<2x64x64xf32>
    %cst_78 = arith.constant 0.000000e+00 : f32
    %118 = vector.broadcast %cst_78 : f32 to vector<2x64x64xf32>
    %119 = arith.maximumf %117, %118 : vector<2x64x64xf32>
    %120 = vector.shape_cast %119 : vector<2x64x64xf32> to vector<128x64xf32>
    %121 = arith.truncf %120 : vector<128x64xf32> to vector<128x64xbf16>
    %c0_79 = arith.constant 0 : index
    %c0_80 = arith.constant 0 : index
    %122 = vector.load %arg10[%c0_79, %c0_80] : memref<64x64xbf16, #tpu.memory_space<vmem>>, vector<64x64xbf16>
    %cst_81 = arith.constant dense<0.000000e+00> : vector<128x64xf32>
    %123 = tpu.matmul %121, %122, %cst_81 {dimension_numbers = #tpu.dot_dimension_numbers<[1], [0], [0], [1], [0, 0, 1, 1], [], []>} : vector<128x64xbf16>, vector<64x64xbf16>, vector<128x64xf32> -> vector<128x64xf32>
    %c0_82 = arith.constant 0 : index
    %c0_83 = arith.constant 0 : index
    %124 = vector.load %arg11[%c0_82, %c0_83] : memref<32x64xbf16, #tpu.memory_space<vmem>>, vector<32x64xbf16>
    %cst_84 = arith.constant dense<0.000000e+00> : vector<128x64xf32>
    %125 = tpu.matmul %10, %124, %cst_84 {dimension_numbers = #tpu.dot_dimension_numbers<[1], [0], [0], [1], [0, 0, 1, 1], [], []>} : vector<128x32xbf16>, vector<32x64xbf16>, vector<128x64xf32> -> vector<128x64xf32>
    %126 = arith.addf %123, %125 : vector<128x64xf32>
    %c0_85 = arith.constant 0 : index
    %c0_86 = arith.constant 0 : index
    %127 = vector.load %arg5[%c0_85, %c0_86] : memref<1x64xf32, #tpu.memory_space<vmem>>, vector<1x64xf32>
    %128 = vector.broadcast %127 : vector<1x64xf32> to vector<128x64xf32>
    %129 = arith.addf %126, %128 : vector<128x64xf32>
    %130 = vector.shape_cast %129 : vector<128x64xf32> to vector<2x8x8x64xf32>
    %c0_87 = arith.constant 0 : index
    %c0_88 = arith.constant 0 : index
    %c0_89 = arith.constant 0 : index
    %c0_90 = arith.constant 0 : index
    %131 = vector.load %arg12[%c0_87, %c0_88, %c0_89, %c0_90] : memref<2x8x8x64xf32, #tpu.memory_space<vmem>>, vector<2x8x8x64xf32>
    tpu.vector_store %arg12[%c0_87, %c0_88, %c0_89, %c0_90], %130 {strides = array<i32>} : memref<2x8x8x64xf32, #tpu.memory_space<vmem>>, vector<2x8x8x64xf32>,
    return
  }
  func.func @transform_0(%arg0: i32) -> (i32, i32, i32, i32) {
    %c0_i32 = arith.constant 0 : i32
    %c0_i32_0 = arith.constant 0 : i32
    %c0_i32_1 = arith.constant 0 : i32
    %c0_i32_2 = arith.constant 0 : i32
    return %arg0, %c0_i32, %c0_i32_0, %c0_i32_1 : i32, i32, i32, i32
  }
  func.func @transform_1(%arg0: i32) -> (i32, i32) {
    %c0_i32 = arith.constant 0 : i32
    %c0_i32_0 = arith.constant 0 : i32
    %c0_i32_1 = arith.constant 0 : i32
    return %c0_i32, %c0_i32_0 : i32, i32
  }
  func.func @transform_2(%arg0: i32) -> (i32, i32) {
    %c0_i32 = arith.constant 0 : i32
    %c0_i32_0 = arith.constant 0 : i32
    %c0_i32_1 = arith.constant 0 : i32
    return %c0_i32, %c0_i32_0 : i32, i32
  }
  func.func @transform_3(%arg0: i32) -> (i32, i32) {
    %c0_i32 = arith.constant 0 : i32
    %c0_i32_0 = arith.constant 0 : i32
    %c0_i32_1 = arith.constant 0 : i32
    return %c0_i32, %c0_i32_0 : i32, i32
  }
  func.func @transform_4(%arg0: i32) -> (i32, i32) {
    %c0_i32 = arith.constant 0 : i32
    %c0_i32_0 = arith.constant 0 : i32
    %c0_i32_1 = arith.constant 0 : i32
    return %c0_i32, %c0_i32_0 : i32, i32
  }
  func.func @transform_5(%arg0: i32) -> (i32, i32) {
    %c0_i32 = arith.constant 0 : i32
    %c0_i32_0 = arith.constant 0 : i32
    %c0_i32_1 = arith.constant 0 : i32
    return %c0_i32, %c0_i32_0 : i32, i32
  }
  func.func @transform_6(%arg0: i32) -> (i32, i32) {
    %c0_i32 = arith.constant 0 : i32
    %c0_i32_0 = arith.constant 0 : i32
    %c0_i32_1 = arith.constant 0 : i32
    return %c0_i32, %c0_i32_0 : i32, i32
  }
  func.func @transform_7(%arg0: i32) -> (i32, i32) {
    %c0_i32 = arith.constant 0 : i32
    %c0_i32_0 = arith.constant 0 : i32
    %c0_i32_1 = arith.constant 0 : i32
    return %c0_i32, %c0_i32_0 : i32, i32
  }
  func.func @transform_8(%arg0: i32) -> (i32, i32) {
    %c0_i32 = arith.constant 0 : i32
    %c0_i32_0 = arith.constant 0 : i32
    %c0_i32_1 = arith.constant 0 : i32
    return %c0_i32, %c0_i32_0 : i32, i32
  }
  func.func @transform_9(%arg0: i32) -> (i32, i32) {
    %c0_i32 = arith.constant 0 : i32
    %c0_i32_0 = arith.constant 0 : i32
    %c0_i32_1 = arith.constant 0 : i32
    return %c0_i32, %c0_i32_0 : i32, i32
  }
  func.func @transform_10(%arg0: i32) -> (i32, i32) {
    %c0_i32 = arith.constant 0 : i32
    %c0_i32_0 = arith.constant 0 : i32
    %c0_i32_1 = arith.constant 0 : i32
    return %c0_i32, %c0_i32_0 : i32, i32
  }
  func.func @transform_11(%arg0: i32) -> (i32, i32, i32, i32) {
    %c0_i32 = arith.constant 0 : i32
    %c0_i32_0 = arith.constant 0 : i32
    %c0_i32_1 = arith.constant 0 : i32
    %c0_i32_2 = arith.constant 0 : i32
    return %arg0, %c0_i32, %c0_i32_0, %c0_i32_1 : i32, i32, i32, i32
  }
}

</mosaic_0001>

<llo_original>
// kernel: tpu_custom_call.1
$region0: #{tpu_custom_call.1}
  #allocation0 [shape = 'u32[]', space=smem, size = 0x4, offset = 0x4, fixed_abs, tag = 'smem constant byte address 0x4 - core index']
  #allocation1 [shape = 'u32[144,128]{1,0:T(1,128)}', space=vmem, size = 0x12000, scoped, tag = 'internal scratch']
  #allocation2 [shape = 'f32[2,10,10,64]{3,2,1,0:T(8,128)}', space=vmem, size = 0x28000, scoped, tag = 'scratch operand']
  %s0 = inlined_call_operand.hbm [shape: f32[2,8,8,32], index: 0, kind: input, shape index: {}]
  %s1 = inlined_call_operand.vmem [shape: f32[2,32], index: 1, kind: input, shape index: {}]
  %s2 = inlined_call_operand.hbm [shape: f32[7,64], index: 2, kind: input, shape index: {}]
  %s3 = inlined_call_operand.hbm [shape: f32[1,8], index: 3, kind: input, shape index: {}]
  %s4 = inlined_call_operand.hbm [shape: f32[1,64], index: 4, kind: input, shape index: {}]
  %s5 = inlined_call_operand.vmem [shape: bf16[32,64], index: 5, kind: input, shape index: {}]
  %s6 = inlined_call_operand.vmem [shape: f32[9,64], index: 6, kind: input, shape index: {}]
  %s7 = inlined_call_operand.vmem [shape: f32[64,8], index: 7, kind: input, shape index: {}]
  %s8 = inlined_call_operand.vmem [shape: f32[8,64], index: 8, kind: input, shape index: {}]
  %s9 = inlined_call_operand.vmem [shape: bf16[64,64], index: 9, kind: input, shape index: {}]
  %s10 = inlined_call_operand.vmem [shape: bf16[32,64], index: 10, kind: input, shape index: {}]
  %s11 = inlined_call_operand.hbm [shape: f32[2,8,8,64], index: 11, kind: output, shape index: {}]
  %s12 = sld [smem:[#allocation0]]
  $region70: #{tpu_custom_call.1} parent=0
    _
  %s14 = ssub.s32 1, %s12
  %s15 = scalar_select 0, %s14, %s12
  $region1: #{tpu_custom_call.1} parent=0
    #allocation3 [shape = 'u8[65536]{0}', space=vmem, size = 0x10000, scoped, tag = 'input window, operand 0, single buffered']
    #allocation4 [shape = 's32[1]{0}', space=sflag, size = 0x4, scoped, tag = 'scoped memory for tpu_custom_call.1']
    #allocation5 [shape = 's32[1]{0}', space=sflag, size = 0x4, scoped, tag = 'scoped memory for tpu_custom_call.1']
    #allocation6 [shape = 'u8[4096]{0}', space=vmem, size = 0x1000, scoped, tag = 'input window, operand 2, single buffered']
    #allocation7 [shape = 's32[1]{0}', space=sflag, size = 0x4, scoped, tag = 'scoped memory for tpu_custom_call.1']
    #allocation8 [shape = 'u8[512]{0}', space=vmem, size = 0x400, scoped, tag = 'input window, operand 3, single buffered']
    #allocation9 [shape = 'u8[512]{0}', space=vmem, size = 0x400, scoped, tag = 'input window, operand 4, single buffered']
    #allocation10 [shape = 's32[1]{0}', space=sflag, size = 0x4, scoped, tag = 'scoped memory for tpu_custom_call.1']
    #allocation11 [shape = 'u8[65536]{0}', space=vmem, size = 0x10000, scoped, tag = 'output window, operand 0, single buffered']
    %16 = vsyncpa [#allocation4], 0
    %17 = vsyncpa [#allocation7], 0
    %18 = vsyncpa [#allocation10], 0
    %19 = vsyncpa [#allocation5], 0
    // Predicated region
    $region2: #{tpu_custom_call.1} parent=1 // pred_check
      _
    $region3: #{tpu_custom_call.1} parent=1 // pred_check_branch
      %21 = sbr.rel (0) target = $region5
    $region4: #{tpu_custom_call.1} parent=1 // pred_region
      %s23 = ssub.s32 2048, 2048
      %24 = vsyncadd [#allocation4], %s23
      %s25 = sshll.u32 [#allocation3], 4
      %s26 = int_to_ptr.vmem [resolvable:$true] %s25
      %31 = dma.hbm_to_vmem [thread:$0]  %s0, 2048, %s26, [#allocation4], 128, 128, 8
    $region5: #{tpu_custom_call.1} parent=1 // pred_fallthru
      _
    // Predicated region
    $region6: #{tpu_custom_call.1} parent=1 // pred_check
      _
    $region7: #{tpu_custom_call.1} parent=1 // pred_check_branch
      %33 = sbr.rel (0) target = $region9
    $region8: #{tpu_custom_call.1} parent=1 // pred_region
      _
    $region9: #{tpu_custom_call.1} parent=1 // pred_fallthru
      _
    // Predicated region
    $region10: #{tpu_custom_call.1} parent=1 // pred_check
      _
    $region11: #{tpu_custom_call.1} parent=1 // pred_check_branch
      %35 = sbr.rel (0) target = $region13
    $region12: #{tpu_custom_call.1} parent=1 // pred_region
      %s37 = ssub.s32 128, 128
      %38 = vsyncadd [#allocation7], %s37
      %s40 = sshll.u32 [#allocation6], 4
      %s41 = int_to_ptr.vmem [resolvable:$true] %s40
      %43 = dma.hbm_to_vmem [thread:$0]  %s2, 128, %s41, [#allocation7]
    $region13: #{tpu_custom_call.1} parent=1 // pred_fallthru
      _
    // Predicated region
    $region14: #{tpu_custom_call.1} parent=1 // pred_check
      _
    $region15: #{tpu_custom_call.1} parent=1 // pred_check_branch
      %45 = sbr.rel (0) target = $region17
    $region16: #{tpu_custom_call.1} parent=1 // pred_region
      %s47 = ssub.s32 16, 16
      %48 = vsyncadd [#allocation7], %s47
      %s50 = sshll.u32 [#allocation8], 4
      %s51 = int_to_ptr.vmem [resolvable:$true] %s50
      %53 = dma.hbm_to_vmem [thread:$0]  %s3, 16, %s51, [#allocation7]
    $region17: #{tpu_custom_call.1} parent=1 // pred_fallthru
      _
    // Predicated region
    $region18: #{tpu_custom_call.1} parent=1 // pred_check
      _
    $region19: #{tpu_custom_call.1} parent=1 // pred_check_branch
      %55 = sbr.rel (0) target = $region21
    $region20: #{tpu_custom_call.1} parent=1 // pred_region
      %s57 = ssub.s32 16, 16
      %58 = vsyncadd [#allocation10], %s57
      %s60 = sshll.u32 [#allocation9], 4
      %s61 = int_to_ptr.vmem [resolvable:$true] %s60
      %63 = dma.hbm_to_vmem [thread:$0]  %s4, 16, %s61, [#allocation10]
    $region21: #{tpu_custom_call.1} parent=1 // pred_fallthru
      _
    // Predicated region
    $region22: #{tpu_custom_call.1} parent=1 // pred_check
      _
    $region23: #{tpu_custom_call.1} parent=1 // pred_check_branch
      %65 = sbr.rel (0) target = $region25
    $region24: #{tpu_custom_call.1} parent=1 // pred_region
      _
    $region25: #{tpu_custom_call.1} parent=1 // pred_fallthru
      _
    // Predicated region
    $region26: #{tpu_custom_call.1} parent=1 // pred_check
      _
    $region27: #{tpu_custom_call.1} parent=1 // pred_check_branch
      %67 = sbr.rel (0) target = $region29
    $region28: #{tpu_custom_call.1} parent=1 // pred_region
      _
    $region29: #{tpu_custom_call.1} parent=1 // pred_fallthru
      _
    // Predicated region
    $region30: #{tpu_custom_call.1} parent=1 // pred_check
      _
    $region31: #{tpu_custom_call.1} parent=1 // pred_check_branch
      %69 = sbr.rel (0) target = $region33
    $region32: #{tpu_custom_call.1} parent=1 // pred_region
      _
    $region33: #{tpu_custom_call.1} parent=1 // pred_fallthru
      _
    // Predicated region
    $region34: #{tpu_custom_call.1} parent=1 // pred_check
      _
    $region35: #{tpu_custom_call.1} parent=1 // pred_check_branch
      %71 = sbr.rel (0) target = $region37
    $region36: #{tpu_custom_call.1} parent=1 // pred_region
      _
    $region37: #{tpu_custom_call.1} parent=1 // pred_fallthru
      _
    // Predicated region
    $region38: #{tpu_custom_call.1} parent=1 // pred_check
      _
    $region39: #{tpu_custom_call.1} parent=1 // pred_check_branch
      %73 = sbr.rel (0) target = $region41
    $region40: #{tpu_custom_call.1} parent=1 // pred_region
      _
    $region41: #{tpu_custom_call.1} parent=1 // pred_fallthru
      _
    // Predicated region
    $region42: #{tpu_custom_call.1} parent=1 // pred_check
      _
    $region43: #{tpu_custom_call.1} parent=1 // pred_check_branch
      %75 = sbr.rel (0) target = $region45
    $region44: #{tpu_custom_call.1} parent=1 // pred_region
      _
    $region45: #{tpu_custom_call.1} parent=1 // pred_fallthru
      _
    // Predicated region
    $region46: #{tpu_custom_call.1} parent=1 // pred_check
      _
    $region47: #{tpu_custom_call.1} parent=1 // pred_check_branch
      %77 = sbr.rel (0) target = $region49
    $region48: #{tpu_custom_call.1} parent=1 // pred_region
      %78 = dma.done [#allocation4], 2048
    $region49: #{tpu_custom_call.1} parent=1 // pred_fallthru
      _
    // Predicated region
    $region50: #{tpu_custom_call.1} parent=1 // pred_check
      _
    $region51: #{tpu_custom_call.1} parent=1 // pred_check_branch
      %80 = sbr.rel (0) target = $region53
    $region52: #{tpu_custom_call.1} parent=1 // pred_region
      %81 = dma.done [#allocation7], 128
    $region53: #{tpu_custom_call.1} parent=1 // pred_fallthru
      _
    // Predicated region
    $region54: #{tpu_custom_call.1} parent=1 // pred_check
      _
    $region55: #{tpu_custom_call.1} parent=1 // pred_check_branch
      %83 = sbr.rel (0) target = $region57
    $region56: #{tpu_custom_call.1} parent=1 // pred_region
      %84 = dma.done [#allocation7], 16
    $region57: #{tpu_custom_call.1} parent=1 // pred_fallthru
      _
    // Predicated region
    $region58: #{tpu_custom_call.1} parent=1 // pred_check
      _
    $region59: #{tpu_custom_call.1} parent=1 // pred_check_branch
      %86 = sbr.rel (0) target = $region61
    $region60: #{tpu_custom_call.1} parent=1 // pred_region
      %87 = dma.done [#allocation10], 16
    $region61: #{tpu_custom_call.1} parent=1 // pred_fallthru
      _
    %v89 = vld [vmem:[%s1] sm:$0x1]
    %v90 = vld [vmem:[%s1 + $0x1] sm:$0x1]
    %v91 = vld [vmem:[#allocation3] sm:$0xff]
    %v92 = vld [vmem:[#allocation3 + $0x8] sm:$0xff]
    %v93 = vld [vmem:[#allocation3 + $0x10] sm:$0xff]
    %v94 = vld [vmem:[#allocation3 + $0x18] sm:$0xff]
    %v95 = vld [vmem:[#allocation3 + $0x20] sm:$0xff]
    %v96 = vld [vmem:[#allocation3 + $0x28] sm:$0xff]
    %v97 = vld [vmem:[#allocation3 + $0x30] sm:$0xff]
    %v98 = vld [vmem:[#allocation3 + $0x38] sm:$0xff]
    %v99 = vld [vmem:[#allocation3 + $0x40] sm:$0xff]
    %v100 = vld [vmem:[#allocation3 + $0x48] sm:$0xff]
    %v101 = vld [vmem:[#allocation3 + $0x50] sm:$0xff]
    %v102 = vld [vmem:[#allocation3 + $0x58] sm:$0xff]
    %v103 = vld [vmem:[#allocation3 + $0x60] sm:$0xff]
    %v104 = vld [vmem:[#allocation3 + $0x68] sm:$0xff]
    %v105 = vld [vmem:[#allocation3 + $0x70] sm:$0xff]
    %v106 = vld [vmem:[#allocation3 + $0x78] sm:$0xff]
    %v107 = vlaneseq
    %v108 = vshrl.u32 %v107, 7
    %v109 = vsub.s32 0, %v108
    %v110 = vrot.slane %v89, %v109
    %v111 = vmul.f32 %v91, %v110
    %v112 = vmul.f32 %v92, %v110
    %v113 = vmul.f32 %v93, %v110
    %v114 = vmul.f32 %v94, %v110
    %v115 = vmul.f32 %v95, %v110
    %v116 = vmul.f32 %v96, %v110
    %v117 = vmul.f32 %v97, %v110
    %v118 = vmul.f32 %v98, %v110
    %v119 = vmul.f32 %v99, %v110
    %v120 = vmul.f32 %v100, %v110
    %v121 = vmul.f32 %v101, %v110
    %v122 = vmul.f32 %v102, %v110
    %v123 = vmul.f32 %v103, %v110
    %v124 = vmul.f32 %v104, %v110
    %v125 = vmul.f32 %v105, %v110
    %v126 = vmul.f32 %v106, %v110
    %v127 = vlaneseq
    %v128 = vshrl.u32 %v127, 7
    %v129 = vsub.s32 0, %v128
    %v130 = vrot.slane %v90, %v129
    %v131 = vadd.f32 %v111, %v130
    %v132 = vadd.f32 %v112, %v130
    %v133 = vadd.f32 %v113, %v130
    %v134 = vadd.f32 %v114, %v130
    %v135 = vadd.f32 %v115, %v130
    %v136 = vadd.f32 %v116, %v130
    %v137 = vadd.f32 %v117, %v130
    %v138 = vadd.f32 %v118, %v130
    %v139 = vadd.f32 %v119, %v130
    %v140 = vadd.f32 %v120, %v130
    %v141 = vadd.f32 %v121, %v130
    %v142 = vadd.f32 %v122, %v130
    %v143 = vadd.f32 %v123, %v130
    %v144 = vadd.f32 %v124, %v130
    %v145 = vadd.f32 %v125, %v130
    %v146 = vadd.f32 %v126, %v130
    %v147 = vmax.f32 %v131, 0.0
    %v148 = vmax.f32 %v132, 0.0
    %v149 = vmax.f32 %v133, 0.0
    %v150 = vmax.f32 %v134, 0.0
    %v151 = vmax.f32 %v135, 0.0
    %v152 = vmax.f32 %v136, 0.0
    %v153 = vmax.f32 %v137, 0.0
    %v154 = vmax.f32 %v138, 0.0
    %v155 = vmax.f32 %v139, 0.0
    %v156 = vmax.f32 %v140, 0.0
    %v157 = vmax.f32 %v141, 0.0
    %v158 = vmax.f32 %v142, 0.0
    %v159 = vmax.f32 %v143, 0.0
    %v160 = vmax.f32 %v144, 0.0
    %v161 = vmax.f32 %v145, 0.0
    %v162 = vmax.f32 %v146, 0.0
    %v163 = vpack.c.bf16 %v148, %v147
    %v164 = vpack.c.bf16 %v150, %v149
    %v165 = vpack.c.bf16 %v152, %v151
    %v166 = vpack.c.bf16 %v154, %v153
    %v167 = vpack.c.bf16 %v156, %v155
    %v168 = vpack.c.bf16 %v158, %v157
    %v169 = vpack.c.bf16 %v160, %v159
    %v170 = vpack.c.bf16 %v162, %v161
    %v171 = vld [vmem:[%s5] sm:$0xf]
    %v172 = vld [vmem:[%s5 + $0x4] sm:$0xf]
    %v173 = vld [vmem:[%s5 + $0x8] sm:$0xf]
    %v174 = vld [vmem:[%s5 + $0xc] sm:$0xf]
    %v175 = vld [vmem:[#allocation6] sm:$0x1]
    %v176 = vlaneseq
    %v177 = vshrl.u32 %v176, 7
    %v178 = vsub.s32 0, %v177
    %v179 = vrot.slane %v175, %v178
    %v184 = vunpack.c.l.b16 %v171
    %v185 = vunpack.c.l.b16 %v172
    %v186 = vunpack.c.l.b16 %v173
    %v187 = vunpack.c.l.b16 %v174
    %v188 = vpack.c.b16 %v185, %v184
    %v189 = vpack.c.b16 %v187, %v186
    %vm192 = vcmask 261120
    %v194 = vsel %vm192, %v163, 0
    %v197 = vsel %vm192, %v164, 0
    %v200 = vsel %vm192, %v165, 0
    %v203 = vsel %vm192, %v166, 0
    %v206 = vsel %vm192, %v167, 0
    %v209 = vsel %vm192, %v168, 0
    %v212 = vsel %vm192, %v169, 0
    %v215 = vsel %vm192, %v170, 0
    %217 = vmatprep.subr.bf16.mxu0 0
    %218 = vmatpush1.bf16.msra.mxu0 %v188
    %219 = vmatprep.subr.bf16.mxu0 0
    %220 = vmatpush1.bf16.msra.mxu0 %v189
    %221 = vmatprep.subr.bf16.mxu0 0
    %222 = vmatpush1.bf16.msra.mxu0 0
    %223 = vmatprep.subr.bf16.mxu0 0
    %224 = vmatpush1.bf16.msra.mxu0 0
    %225 = vmatprep.subr.bf16.mxu0 0
    %226 = vmatpush1.bf16.msra.mxu0 0
    %227 = vmatprep.subr.bf16.mxu0 0
    %228 = vmatpush1.bf16.msra.mxu0 0
    %229 = vmatprep.subr.bf16.mxu0 0
    %230 = vmatpush1.bf16.msra.mxu0 0
    %231 = vmatprep.subr.bf16.mxu0 0
    %232 = vmatpush1.bf16.msra.mxu0 0
    %233 = vmatprep.subr.bf16.mxu0 0
    %234 = vmatpush1.bf16.msra.mxu0 0
    %235 = vmatprep.subr.bf16.mxu0 0
    %236 = vmatpush1.bf16.msra.mxu0 0
    %237 = vmatprep.subr.bf16.mxu0 0
    %238 = vmatpush1.bf16.msra.mxu0 0
    %239 = vmatprep.subr.bf16.mxu0 0
    %240 = vmatpush1.bf16.msra.mxu0 0
    %241 = vmatprep.subr.bf16.mxu0 0
    %242 = vmatpush1.bf16.msra.mxu0 0
    %243 = vmatprep.subr.bf16.mxu0 0
    %244 = vmatpush1.bf16.msra.mxu0 0
    %245 = vmatprep.subr.bf16.mxu0 0
    %246 = vmatpush1.bf16.msra.mxu0 0
    %247 = vmatprep.subr.bf16.mxu0 0
    %248 = vmatpush1.bf16.msra.mxu0 0
    %249 = vmatprep.mubr.bf16.mxu0 0
    %250 = vmatmul.mubr.bf16.gmra.mrb[0].mxu0 %v194
    %v251 = vpop.f32.mrb[0].mxu0
    %v252 = vadd.f32 %v179, %v251
    %v253 = vpop.f32.mrb[0].mxu0
    %v254 = vpop.f32.mrb[0].mxu0
    %v255 = vadd.f32 %v179, %v254
    %v256 = vpop.f32.mrb[0].mxu0
    %257 = vmatprep.mubr.bf16.mxu0 0
    %258 = vmatmul.mubr.bf16.gmra.mrb[0].mxu0 %v197
    %v259 = vpop.f32.mrb[0].mxu0
    %v260 = vadd.f32 %v179, %v259
    %v261 = vpop.f32.mrb[0].mxu0
    %v262 = vpop.f32.mrb[0].mxu0
    %v263 = vadd.f32 %v179, %v262
    %v264 = vpop.f32.mrb[0].mxu0
    %265 = vmatprep.mubr.bf16.mxu0 0
    %266 = vmatmul.mubr.bf16.gmra.mrb[0].mxu0 %v200
    %v267 = vpop.f32.mrb[0].mxu0
    %v268 = vadd.f32 %v179, %v267
    %v269 = vpop.f32.mrb[0].mxu0
    %v270 = vpop.f32.mrb[0].mxu0
    %v271 = vadd.f32 %v179, %v270
    %v272 = vpop.f32.mrb[0].mxu0
    %273 = vmatprep.mubr.bf16.mxu0 0
    %274 = vmatmul.mubr.bf16.gmra.mrb[0].mxu0 %v203
    %v275 = vpop.f32.mrb[0].mxu0
    %v276 = vadd.f32 %v179, %v275
    %v277 = vpop.f32.mrb[0].mxu0
    %v278 = vpop.f32.mrb[0].mxu0
    %v279 = vadd.f32 %v179, %v278
    %v280 = vpop.f32.mrb[0].mxu0
    %281 = vmatprep.mubr.bf16.mxu0 0
    %282 = vmatmul.mubr.bf16.gmra.mrb[0].mxu0 %v206
    %v283 = vpop.f32.mrb[0].mxu0
    %v284 = vadd.f32 %v179, %v283
    %v285 = vpop.f32.mrb[0].mxu0
    %v286 = vpop.f32.mrb[0].mxu0
    %v287 = vadd.f32 %v179, %v286
    %v288 = vpop.f32.mrb[0].mxu0
    %289 = vmatprep.mubr.bf16.mxu0 0
    %290 = vmatmul.mubr.bf16.gmra.mrb[0].mxu0 %v209
    %v291 = vpop.f32.mrb[0].mxu0
    %v292 = vadd.f32 %v179, %v291
    %v293 = vpop.f32.mrb[0].mxu0
    %v294 = vpop.f32.mrb[0].mxu0
    %v295 = vadd.f32 %v179, %v294
    %v296 = vpop.f32.mrb[0].mxu0
    %297 = vmatprep.mubr.bf16.mxu0 0
    %298 = vmatmul.mubr.bf16.gmra.mrb[0].mxu0 %v212
    %v299 = vpop.f32.mrb[0].mxu0
    %v300 = vadd.f32 %v179, %v299
    %v301 = vpop.f32.mrb[0].mxu0
    %v302 = vpop.f32.mrb[0].mxu0
    %v303 = vadd.f32 %v179, %v302
    %v304 = vpop.f32.mrb[0].mxu0
    %305 = vmatprep.mubr.bf16.mxu0 0
    %306 = vmatmul.mubr.bf16.gmra.mrb[0].mxu0 %v215
    %v307 = vpop.f32.mrb[0].mxu0
    %v308 = vadd.f32 %v179, %v307
    %v309 = vpop.f32.mrb[0].mxu0
    %v310 = vpop.f32.mrb[0].mxu0
    %v311 = vadd.f32 %v179, %v310
    %v312 = vpop.f32.mrb[0].mxu0
    %313 = vdwg.mxu0
    %v314 = vld [vmem:[#allocation6 + $0x1] sm:$0x1]
    %v315 = vlaneseq
    %v316 = vshrl.u32 %v315, 7
    %v317 = vsub.s32 0, %v316
    %v318 = vrot.slane %v314, %v317
    %v319 = vmul.f32 %v252, %v318
    %v320 = vmul.f32 %v255, %v318
    %v321 = vmul.f32 %v260, %v318
    %v322 = vmul.f32 %v263, %v318
    %v323 = vmul.f32 %v268, %v318
    %v324 = vmul.f32 %v271, %v318
    %v325 = vmul.f32 %v276, %v318
    %v326 = vmul.f32 %v279, %v318
    %v327 = vmul.f32 %v284, %v318
    %v328 = vmul.f32 %v287, %v318
    %v329 = vmul.f32 %v292, %v318
    %v330 = vmul.f32 %v295, %v318
    %v331 = vmul.f32 %v300, %v318
    %v332 = vmul.f32 %v303, %v318
    %v333 = vmul.f32 %v308, %v318
    %v334 = vmul.f32 %v311, %v318
    %v335 = vld [vmem:[#allocation6 + $0x2] sm:$0x1]
    %v336 = vlaneseq
    %v337 = vshrl.u32 %v336, 7
    %v338 = vsub.s32 0, %v337
    %v339 = vrot.slane %v335, %v338
    %v340 = vadd.f32 %v319, %v339
    %v341 = vadd.f32 %v320, %v339
    %v342 = vadd.f32 %v321, %v339
    %v343 = vadd.f32 %v322, %v339
    %v344 = vadd.f32 %v323, %v339
    %v345 = vadd.f32 %v324, %v339
    %v346 = vadd.f32 %v325, %v339
    %v347 = vadd.f32 %v326, %v339
    %v348 = vadd.f32 %v327, %v339
    %v349 = vadd.f32 %v328, %v339
    %v350 = vadd.f32 %v329, %v339
    %v351 = vadd.f32 %v330, %v339
    %v352 = vadd.f32 %v331, %v339
    %v353 = vadd.f32 %v332, %v339
    %v354 = vadd.f32 %v333, %v339
    %v355 = vadd.f32 %v334, %v339
    %v356 = vmax.f32 %v340, 0.0
    %v357 = vmax.f32 %v341, 0.0
    %v358 = vmax.f32 %v342, 0.0
    %v359 = vmax.f32 %v343, 0.0
    %v360 = vmax.f32 %v344, 0.0
    %v361 = vmax.f32 %v345, 0.0
    %v362 = vmax.f32 %v346, 0.0
    %v363 = vmax.f32 %v347, 0.0
    %v364 = vmax.f32 %v348, 0.0
    %v365 = vmax.f32 %v349, 0.0
    %v366 = vmax.f32 %v350, 0.0
    %v367 = vmax.f32 %v351, 0.0
    %v368 = vmax.f32 %v352, 0.0
    %v369 = vmax.f32 %v353, 0.0
    %v370 = vmax.f32 %v354, 0.0
    %v371 = vmax.f32 %v355, 0.0
    %vm372 = vcmask 523264
    %373 = vst.msk [vmem:[#allocation2] sm:$0xff] %vm372, 0.0
    %vm374 = vcmask 517120
    %375 = vst.msk [vmem:[#allocation2 + $0x8] sm:$0x3] %vm374, 0.0
    %376 = vst.msk [vmem:[#allocation2 + $0x10] sm:$0xff] %vm372, 0.0
    %377 = vst.msk [vmem:[#allocation2 + $0x18] sm:$0x3] %vm374, 0.0
    %378 = vst.msk [vmem:[#allocation2 + $0x20] sm:$0xff] %vm372, 0.0
    %379 = vst.msk [vmem:[#allocation2 + $0x28] sm:$0x3] %vm374, 0.0
    %380 = vst.msk [vmem:[#allocation2 + $0x30] sm:$0xff] %vm372, 0.0
    %381 = vst.msk [vmem:[#allocation2 + $0x38] sm:$0x3] %vm374, 0.0
    %382 = vst.msk [vmem:[#allocation2 + $0x40] sm:$0xff] %vm372, 0.0
    %383 = vst.msk [vmem:[#allocation2 + $0x48] sm:$0x3] %vm374, 0.0
    %384 = vst.msk [vmem:[#allocation2 + $0x50] sm:$0xff] %vm372, 0.0
    %385 = vst.msk [vmem:[#allocation2 + $0x58] sm:$0x3] %vm374, 0.0
    %386 = vst.msk [vmem:[#allocation2 + $0x60] sm:$0xff] %vm372, 0.0
    %387 = vst.msk [vmem:[#allocation2 + $0x68] sm:$0x3] %vm374, 0.0
    %388 = vst.msk [vmem:[#allocation2 + $0x70] sm:$0xff] %vm372, 0.0
    %389 = vst.msk [vmem:[#allocation2 + $0x78] sm:$0x3] %vm374, 0.0
    %390 = vst.msk [vmem:[#allocation2 + $0x80] sm:$0xff] %vm372, 0.0
    %391 = vst.msk [vmem:[#allocation2 + $0x88] sm:$0x3] %vm374, 0.0
    %392 = vst.msk [vmem:[#allocation2 + $0x90] sm:$0xff] %vm372, 0.0
    %393 = vst.msk [vmem:[#allocation2 + $0x98] sm:$0x3] %vm374, 0.0
    %394 = vst.msk [vmem:[#allocation2 + $0xa0] sm:$0xff] %vm372, 0.0
    %395 = vst.msk [vmem:[#allocation2 + $0xa8] sm:$0x3] %vm374, 0.0
    %396 = vst.msk [vmem:[#allocation2 + $0xb0] sm:$0xff] %vm372, 0.0
    %397 = vst.msk [vmem:[#allocation2 + $0xb8] sm:$0x3] %vm374, 0.0
    %398 = vst.msk [vmem:[#allocation2 + $0xc0] sm:$0xff] %vm372, 0.0
    %399 = vst.msk [vmem:[#allocation2 + $0xc8] sm:$0x3] %vm374, 0.0
    %400 = vst.msk [vmem:[#allocation2 + $0xd0] sm:$0xff] %vm372, 0.0
    %401 = vst.msk [vmem:[#allocation2 + $0xd8] sm:$0x3] %vm374, 0.0
    %402 = vst.msk [vmem:[#allocation2 + $0xe0] sm:$0xff] %vm372, 0.0
    %403 = vst.msk [vmem:[#allocation2 + $0xe8] sm:$0x3] %vm374, 0.0
    %404 = vst.msk [vmem:[#allocation2 + $0xf0] sm:$0xff] %vm372, 0.0
    %405 = vst.msk [vmem:[#allocation2 + $0xf8] sm:$0x3] %vm374, 0.0
    %406 = vst.msk [vmem:[#allocation2 + $0x100] sm:$0xff] %vm372, 0.0
    %407 = vst.msk [vmem:[#allocation2 + $0x108] sm:$0x3] %vm374, 0.0
    %408 = vst.msk [vmem:[#allocation2 + $0x110] sm:$0xff] %vm372, 0.0
    %409 = vst.msk [vmem:[#allocation2 + $0x118] sm:$0x3] %vm374, 0.0
    %410 = vst.msk [vmem:[#allocation2 + $0x120] sm:$0xff] %vm372, 0.0
    %411 = vst.msk [vmem:[#allocation2 + $0x128] sm:$0x3] %vm374, 0.0
    %412 = vst.msk [vmem:[#allocation2 + $0x130] sm:$0xff] %vm372, 0.0
    %413 = vst.msk [vmem:[#allocation2 + $0x138] sm:$0x3] %vm374, 0.0
    %s414 = scalar_lea.vmem [#allocation2], 16
    %415 = vst.msk [vmem:[%s414 + $0x1] sm:$0xff] %vm372, %v356
    %416 = vst.msk [vmem:[%s414 + $0x11] sm:$0xff] %vm372, %v357
    %417 = vst.msk [vmem:[%s414 + $0x21] sm:$0xff] %vm372, %v358
    %418 = vst.msk [vmem:[%s414 + $0x31] sm:$0xff] %vm372, %v359
    %419 = vst.msk [vmem:[%s414 + $0x41] sm:$0xff] %vm372, %v360
    %420 = vst.msk [vmem:[%s414 + $0x51] sm:$0xff] %vm372, %v361
    %421 = vst.msk [vmem:[%s414 + $0x61] sm:$0xff] %vm372, %v362
    %422 = vst.msk [vmem:[%s414 + $0x71] sm:$0xff] %vm372, %v363
    %423 = vst.msk [vmem:[%s414 + $0xa1] sm:$0xff] %vm372, %v364
    %424 = vst.msk [vmem:[%s414 + $0xb1] sm:$0xff] %vm372, %v365
    %425 = vst.msk [vmem:[%s414 + $0xc1] sm:$0xff] %vm372, %v366
    %426 = vst.msk [vmem:[%s414 + $0xd1] sm:$0xff] %vm372, %v367
    %427 = vst.msk [vmem:[%s414 + $0xe1] sm:$0xff] %vm372, %v368
    %428 = vst.msk [vmem:[%s414 + $0xf1] sm:$0xff] %vm372, %v369
    %429 = vst.msk [vmem:[%s414 + $0x101] sm:$0xff] %vm372, %v370
    %430 = vst.msk [vmem:[%s414 + $0x111] sm:$0xff] %vm372, %v371
    %v431 = vld [vmem:[%s6] sm:$0xff]
    %v432 = vld [vmem:[%s6 + $0x8] sm:$0x1]
    %v433 = vld [vmem:[#allocation2] sm:$0xff]
    %v434 = vld [vmem:[#allocation2 + $0x10] sm:$0xff]
    %v435 = vld [vmem:[#allocation2 + $0x20] sm:$0xff]
    %v436 = vld [vmem:[#allocation2 + $0x30] sm:$0xff]
    %v437 = vld [vmem:[#allocation2 + $0x40] sm:$0xff]
    %v438 = vld [vmem:[#allocation2 + $0x50] sm:$0xff]
    %v439 = vld [vmem:[#allocation2 + $0x60] sm:$0xff]
    %v440 = vld [vmem:[#allocation2 + $0x70] sm:$0xff]
    %v441 = vld [vmem:[#allocation2 + $0xa0] sm:$0xff]
    %v442 = vld [vmem:[#allocation2 + $0xb0] sm:$0xff]
    %v443 = vld [vmem:[#allocation2 + $0xc0] sm:$0xff]
    %v444 = vld [vmem:[#allocation2 + $0xd0] sm:$0xff]
    %v445 = vld [vmem:[#allocation2 + $0xe0] sm:$0xff]
    %v446 = vld [vmem:[#allocation2 + $0xf0] sm:$0xff]
    %v447 = vld [vmem:[#allocation2 + $0x100] sm:$0xff]
    %v448 = vld [vmem:[#allocation2 + $0x110] sm:$0xff]
    %v449 = vlaneseq
    %v450 = vshrl.u32 %v449, 7
    %v451 = vsub.s32 0, %v450
    %v452 = vrot.slane %v431, %v451
    %v453 = vmul.f32 %v433, %v452
    %v454 = vmul.f32 %v434, %v452
    %v455 = vmul.f32 %v435, %v452
    %v456 = vmul.f32 %v436, %v452
    %v457 = vmul.f32 %v437, %v452
    %v458 = vmul.f32 %v438, %v452
    %v459 = vmul.f32 %v439, %v452
    %v460 = vmul.f32 %v440, %v452
    %v461 = vmul.f32 %v441, %v452
    %v462 = vmul.f32 %v442, %v452
    %v463 = vmul.f32 %v443, %v452
    %v464 = vmul.f32 %v444, %v452
    %v465 = vmul.f32 %v445, %v452
    %v466 = vmul.f32 %v446, %v452
    %v467 = vmul.f32 %v447, %v452
    %v468 = vmul.f32 %v448, %v452
    %v469 = vld [vmem:[#allocation2 + $0x1] sm:$0xff]
    %v470 = vld [vmem:[#allocation2 + $0x11] sm:$0xff]
    %v471 = vld [vmem:[#allocation2 + $0x21] sm:$0xff]
    %v472 = vld [vmem:[#allocation2 + $0x31] sm:$0xff]
    %v473 = vld [vmem:[#allocation2 + $0x41] sm:$0xff]
    %v474 = vld [vmem:[#allocation2 + $0x51] sm:$0xff]
    %v475 = vld [vmem:[#allocation2 + $0x61] sm:$0xff]
    %v476 = vld [vmem:[#allocation2 + $0x71] sm:$0xff]
    %v477 = vld [vmem:[#allocation2 + $0xa1] sm:$0xff]
    %v478 = vld [vmem:[#allocation2 + $0xb1] sm:$0xff]
    %v479 = vld [vmem:[#allocation2 + $0xc1] sm:$0xff]
    %v480 = vld [vmem:[#allocation2 + $0xd1] sm:$0xff]
    %v481 = vld [vmem:[#allocation2 + $0xe1] sm:$0xff]
    %v482 = vld [vmem:[#allocation2 + $0xf1] sm:$0xff]
    %v483 = vld [vmem:[#allocation2 + $0x101] sm:$0xff]
    %v484 = vld [vmem:[#allocation2 + $0x111] sm:$0xff]
    %v485 = vlaneseq
    %v486 = vshrl.u32 %v485, 7
    %v487 = vsub.s32 1, %v486
    %v488 = vrot.slane %v431, %v487
    %v489 = vmul.f32 %v469, %v488
    %v490 = vmul.f32 %v470, %v488
    %v491 = vmul.f32 %v471, %v488
    %v492 = vmul.f32 %v472, %v488
    %v493 = vmul.f32 %v473, %v488
    %v494 = vmul.f32 %v474, %v488
    %v495 = vmul.f32 %v475, %v488
    %v496 = vmul.f32 %v476, %v488
    %v497 = vmul.f32 %v477, %v488
    %v498 = vmul.f32 %v478, %v488
    %v499 = vmul.f32 %v479, %v488
    %v500 = vmul.f32 %v480, %v488
    %v501 = vmul.f32 %v481, %v488
    %v502 = vmul.f32 %v482, %v488
    %v503 = vmul.f32 %v483, %v488
    %v504 = vmul.f32 %v484, %v488
    %v505 = vadd.f32 %v453, %v489
    %v506 = vadd.f32 %v454, %v490
    %v507 = vadd.f32 %v455, %v491
    %v508 = vadd.f32 %v456, %v492
    %v509 = vadd.f32 %v457, %v493
    %v510 = vadd.f32 %v458, %v494
    %v511 = vadd.f32 %v459, %v495
    %v512 = vadd.f32 %v460, %v496
    %v513 = vadd.f32 %v461, %v497
    %v514 = vadd.f32 %v462, %v498
    %v515 = vadd.f32 %v463, %v499
    %v516 = vadd.f32 %v464, %v500
    %v517 = vadd.f32 %v465, %v501
    %v518 = vadd.f32 %v466, %v502
    %v519 = vadd.f32 %v467, %v503
    %v520 = vadd.f32 %v468, %v504
    %v521 = vld [vmem:[#allocation2 + $0x2] sm:$0xff]
    %v522 = vld [vmem:[#allocation2 + $0x12] sm:$0xff]
    %v523 = vld [vmem:[#allocation2 + $0x22] sm:$0xff]
    %v524 = vld [vmem:[#allocation2 + $0x32] sm:$0xff]
    %v525 = vld [vmem:[#allocation2 + $0x42] sm:$0xff]
    %v526 = vld [vmem:[#allocation2 + $0x52] sm:$0xff]
    %v527 = vld [vmem:[#allocation2 + $0x62] sm:$0xff]
    %v528 = vld [vmem:[#allocation2 + $0x72] sm:$0xff]
    %v529 = vld [vmem:[#allocation2 + $0xa2] sm:$0xff]
    %v530 = vld [vmem:[#allocation2 + $0xb2] sm:$0xff]
    %v531 = vld [vmem:[#allocation2 + $0xc2] sm:$0xff]
    %v532 = vld [vmem:[#allocation2 + $0xd2] sm:$0xff]
    %v533 = vld [vmem:[#allocation2 + $0xe2] sm:$0xff]
    %v534 = vld [vmem:[#allocation2 + $0xf2] sm:$0xff]
    %v535 = vld [vmem:[#allocation2 + $0x102] sm:$0xff]
    %v536 = vld [vmem:[#allocation2 + $0x112] sm:$0xff]
    %v537 = vlaneseq
    %v538 = vshrl.u32 %v537, 7
    %v539 = vsub.s32 2, %v538
    %v540 = vrot.slane %v431, %v539
    %v541 = vmul.f32 %v521, %v540
    %v542 = vmul.f32 %v522, %v540
    %v543 = vmul.f32 %v523, %v540
    %v544 = vmul.f32 %v524, %v540
    %v545 = vmul.f32 %v525, %v540
    %v546 = vmul.f32 %v526, %v540
    %v547 = vmul.f32 %v527, %v540
    %v548 = vmul.f32 %v528, %v540
    %v549 = vmul.f32 %v529, %v540
    %v550 = vmul.f32 %v530, %v540
    %v551 = vmul.f32 %v531, %v540
    %v552 = vmul.f32 %v532, %v540
    %v553 = vmul.f32 %v533, %v540
    %v554 = vmul.f32 %v534, %v540
    %v555 = vmul.f32 %v535, %v540
    %v556 = vmul.f32 %v536, %v540
    %v557 = vadd.f32 %v505, %v541
    %v558 = vadd.f32 %v506, %v542
    %v559 = vadd.f32 %v507, %v543
    %v560 = vadd.f32 %v508, %v544
    %v561 = vadd.f32 %v509, %v545
    %v562 = vadd.f32 %v510, %v546
    %v563 = vadd.f32 %v511, %v547
    %v564 = vadd.f32 %v512, %v548
    %v565 = vadd.f32 %v513, %v549
    %v566 = vadd.f32 %v514, %v550
    %v567 = vadd.f32 %v515, %v551
    %v568 = vadd.f32 %v516, %v552
    %v569 = vadd.f32 %v517, %v553
    %v570 = vadd.f32 %v518, %v554
    %v571 = vadd.f32 %v519, %v555
    %v572 = vadd.f32 %v520, %v556
    %v573 = vld [vmem:[%s414] sm:$0xff]
    %v574 = vld [vmem:[%s414 + $0x10] sm:$0xff]
    %v575 = vld [vmem:[%s414 + $0x20] sm:$0xff]
    %v576 = vld [vmem:[%s414 + $0x30] sm:$0xff]
    %v577 = vld [vmem:[%s414 + $0x40] sm:$0xff]
    %v578 = vld [vmem:[%s414 + $0x50] sm:$0xff]
    %v579 = vld [vmem:[%s414 + $0x60] sm:$0xff]
    %v580 = vld [vmem:[%s414 + $0x70] sm:$0xff]
    %v581 = vld [vmem:[%s414 + $0xa0] sm:$0xff]
    %v582 = vld [vmem:[%s414 + $0xb0] sm:$0xff]
    %v583 = vld [vmem:[%s414 + $0xc0] sm:$0xff]
    %v584 = vld [vmem:[%s414 + $0xd0] sm:$0xff]
    %v585 = vld [vmem:[%s414 + $0xe0] sm:$0xff]
    %v586 = vld [vmem:[%s414 + $0xf0] sm:$0xff]
    %v587 = vld [vmem:[%s414 + $0x100] sm:$0xff]
    %v588 = vld [vmem:[%s414 + $0x110] sm:$0xff]
    %v589 = vlaneseq
    %v590 = vshrl.u32 %v589, 7
    %v591 = vsub.s32 3, %v590
    %v592 = vrot.slane %v431, %v591
    %v593 = vmul.f32 %v573, %v592
    %v594 = vmul.f32 %v574, %v592
    %v595 = vmul.f32 %v575, %v592
    %v596 = vmul.f32 %v576, %v592
    %v597 = vmul.f32 %v577, %v592
    %v598 = vmul.f32 %v578, %v592
    %v599 = vmul.f32 %v579, %v592
    %v600 = vmul.f32 %v580, %v592
    %v601 = vmul.f32 %v581, %v592
    %v602 = vmul.f32 %v582, %v592
    %v603 = vmul.f32 %v583, %v592
    %v604 = vmul.f32 %v584, %v592
    %v605 = vmul.f32 %v585, %v592
    %v606 = vmul.f32 %v586, %v592
    %v607 = vmul.f32 %v587, %v592
    %v608 = vmul.f32 %v588, %v592
    %v609 = vadd.f32 %v557, %v593
    %v610 = vadd.f32 %v558, %v594
    %v611 = vadd.f32 %v559, %v595
    %v612 = vadd.f32 %v560, %v596
    %v613 = vadd.f32 %v561, %v597
    %v614 = vadd.f32 %v562, %v598
    %v615 = vadd.f32 %v563, %v599
    %v616 = vadd.f32 %v564, %v600
    %v617 = vadd.f32 %v565, %v601
    %v618 = vadd.f32 %v566, %v602
    %v619 = vadd.f32 %v567, %v603
    %v620 = vadd.f32 %v568, %v604
    %v621 = vadd.f32 %v569, %v605
    %v622 = vadd.f32 %v570, %v606
    %v623 = vadd.f32 %v571, %v607
    %v624 = vadd.f32 %v572, %v608
    %v625 = vld [vmem:[%s414 + $0x1] sm:$0xff]
    %v626 = vld [vmem:[%s414 + $0x11] sm:$0xff]
    %v627 = vld [vmem:[%s414 + $0x21] sm:$0xff]
    %v628 = vld [vmem:[%s414 + $0x31] sm:$0xff]
    %v629 = vld [vmem:[%s414 + $0x41] sm:$0xff]
    %v630 = vld [vmem:[%s414 + $0x51] sm:$0xff]
    %v631 = vld [vmem:[%s414 + $0x61] sm:$0xff]
    %v632 = vld [vmem:[%s414 + $0x71] sm:$0xff]
    %v633 = vld [vmem:[%s414 + $0xa1] sm:$0xff]
    %v634 = vld [vmem:[%s414 + $0xb1] sm:$0xff]
    %v635 = vld [vmem:[%s414 + $0xc1] sm:$0xff]
    %v636 = vld [vmem:[%s414 + $0xd1] sm:$0xff]
    %v637 = vld [vmem:[%s414 + $0xe1] sm:$0xff]
    %v638 = vld [vmem:[%s414 + $0xf1] sm:$0xff]
    %v639 = vld [vmem:[%s414 + $0x101] sm:$0xff]
    %v640 = vld [vmem:[%s414 + $0x111] sm:$0xff]
    %v641 = vlaneseq
    %v642 = vshrl.u32 %v641, 7
    %v643 = vsub.s32 4, %v642
    %v644 = vrot.slane %v431, %v643
    %v645 = vmul.f32 %v625, %v644
    %v646 = vmul.f32 %v626, %v644
    %v647 = vmul.f32 %v627, %v644
    %v648 = vmul.f32 %v628, %v644
    %v649 = vmul.f32 %v629, %v644
    %v650 = vmul.f32 %v630, %v644
    %v651 = vmul.f32 %v631, %v644
    %v652 = vmul.f32 %v632, %v644
    %v653 = vmul.f32 %v633, %v644
    %v654 = vmul.f32 %v634, %v644
    %v655 = vmul.f32 %v635, %v644
    %v656 = vmul.f32 %v636, %v644
    %v657 = vmul.f32 %v637, %v644
    %v658 = vmul.f32 %v638, %v644
    %v659 = vmul.f32 %v639, %v644
    %v660 = vmul.f32 %v640, %v644
    %v661 = vadd.f32 %v609, %v645
    %v662 = vadd.f32 %v610, %v646
    %v663 = vadd.f32 %v611, %v647
    %v664 = vadd.f32 %v612, %v648
    %v665 = vadd.f32 %v613, %v649
    %v666 = vadd.f32 %v614, %v650
    %v667 = vadd.f32 %v615, %v651
    %v668 = vadd.f32 %v616, %v652
    %v669 = vadd.f32 %v617, %v653
    %v670 = vadd.f32 %v618, %v654
    %v671 = vadd.f32 %v619, %v655
    %v672 = vadd.f32 %v620, %v656
    %v673 = vadd.f32 %v621, %v657
    %v674 = vadd.f32 %v622, %v658
    %v675 = vadd.f32 %v623, %v659
    %v676 = vadd.f32 %v624, %v660
    %v677 = vld [vmem:[%s414 + $0x2] sm:$0xff]
    %v678 = vld [vmem:[%s414 + $0x12] sm:$0xff]
    %v679 = vld [vmem:[%s414 + $0x22] sm:$0xff]
    %v680 = vld [vmem:[%s414 + $0x32] sm:$0xff]
    %v681 = vld [vmem:[%s414 + $0x42] sm:$0xff]
    %v682 = vld [vmem:[%s414 + $0x52] sm:$0xff]
    %v683 = vld [vmem:[%s414 + $0x62] sm:$0xff]
    %v684 = vld [vmem:[%s414 + $0x72] sm:$0xff]
    %v685 = vld [vmem:[%s414 + $0xa2] sm:$0xff]
    %v686 = vld [vmem:[%s414 + $0xb2] sm:$0xff]
    %v687 = vld [vmem:[%s414 + $0xc2] sm:$0xff]
    %v688 = vld [vmem:[%s414 + $0xd2] sm:$0xff]
    %v689 = vld [vmem:[%s414 + $0xe2] sm:$0xff]
    %v690 = vld [vmem:[%s414 + $0xf2] sm:$0xff]
    %v691 = vld [vmem:[%s414 + $0x102] sm:$0xff]
    %v692 = vld [vmem:[%s414 + $0x112] sm:$0xff]
    %v693 = vlaneseq
    %v694 = vshrl.u32 %v693, 7
    %v695 = vsub.s32 5, %v694
    %v696 = vrot.slane %v431, %v695
    %v697 = vmul.f32 %v677, %v696
    %v698 = vmul.f32 %v678, %v696
    %v699 = vmul.f32 %v679, %v696
    %v700 = vmul.f32 %v680, %v696
    %v701 = vmul.f32 %v681, %v696
    %v702 = vmul.f32 %v682, %v696
    %v703 = vmul.f32 %v683, %v696
    %v704 = vmul.f32 %v684, %v696
    %v705 = vmul.f32 %v685, %v696
    %v706 = vmul.f32 %v686, %v696
    %v707 = vmul.f32 %v687, %v696
    %v708 = vmul.f32 %v688, %v696
    %v709 = vmul.f32 %v689, %v696
    %v710 = vmul.f32 %v690, %v696
    %v711 = vmul.f32 %v691, %v696
    %v712 = vmul.f32 %v692, %v696
    %v713 = vadd.f32 %v661, %v697
    %v714 = vadd.f32 %v662, %v698
    %v715 = vadd.f32 %v663, %v699
    %v716 = vadd.f32 %v664, %v700
    %v717 = vadd.f32 %v665, %v701
    %v718 = vadd.f32 %v666, %v702
    %v719 = vadd.f32 %v667, %v703
    %v720 = vadd.f32 %v668, %v704
    %v721 = vadd.f32 %v669, %v705
    %v722 = vadd.f32 %v670, %v706
    %v723 = vadd.f32 %v671, %v707
    %v724 = vadd.f32 %v672, %v708
    %v725 = vadd.f32 %v673, %v709
    %v726 = vadd.f32 %v674, %v710
    %v727 = vadd.f32 %v675, %v711
    %v728 = vadd.f32 %v676, %v712
    %s729 = scalar_lea.vmem [#allocation2], 32
    %v730 = vld [vmem:[%s729] sm:$0xff]
    %v731 = vld [vmem:[%s729 + $0x10] sm:$0xff]
    %v732 = vld [vmem:[%s729 + $0x20] sm:$0xff]
    %v733 = vld [vmem:[%s729 + $0x30] sm:$0xff]
    %v734 = vld [vmem:[%s729 + $0x40] sm:$0xff]
    %v735 = vld [vmem:[%s729 + $0x50] sm:$0xff]
    %v736 = vld [vmem:[%s729 + $0x60] sm:$0xff]
    %v737 = vld [vmem:[%s729 + $0x70] sm:$0xff]
    %v738 = vld [vmem:[%s729 + $0xa0] sm:$0xff]
    %v739 = vld [vmem:[%s729 + $0xb0] sm:$0xff]
    %v740 = vld [vmem:[%s729 + $0xc0] sm:$0xff]
    %v741 = vld [vmem:[%s729 + $0xd0] sm:$0xff]
    %v742 = vld [vmem:[%s729 + $0xe0] sm:$0xff]
    %v743 = vld [vmem:[%s729 + $0xf0] sm:$0xff]
    %v744 = vld [vmem:[%s729 + $0x100] sm:$0xff]
    %v745 = vld [vmem:[%s729 + $0x110] sm:$0xff]
    %v746 = vlaneseq
    %v747 = vshrl.u32 %v746, 7
    %v748 = vsub.s32 6, %v747
    %v749 = vrot.slane %v431, %v748
    %v750 = vmul.f32 %v730, %v749
    %v751 = vmul.f32 %v731, %v749
    %v752 = vmul.f32 %v732, %v749
    %v753 = vmul.f32 %v733, %v749
    %v754 = vmul.f32 %v734, %v749
    %v755 = vmul.f32 %v735, %v749
    %v756 = vmul.f32 %v736, %v749
    %v757 = vmul.f32 %v737, %v749
    %v758 = vmul.f32 %v738, %v749
    %v759 = vmul.f32 %v739, %v749
    %v760 = vmul.f32 %v740, %v749
    %v761 = vmul.f32 %v741, %v749
    %v762 = vmul.f32 %v742, %v749
    %v763 = vmul.f32 %v743, %v749
    %v764 = vmul.f32 %v744, %v749
    %v765 = vmul.f32 %v745, %v749
    %v766 = vadd.f32 %v713, %v750
    %v767 = vadd.f32 %v714, %v751
    %v768 = vadd.f32 %v715, %v752
    %v769 = vadd.f32 %v716, %v753
    %v770 = vadd.f32 %v717, %v754
    %v771 = vadd.f32 %v718, %v755
    %v772 = vadd.f32 %v719, %v756
    %v773 = vadd.f32 %v720, %v757
    %v774 = vadd.f32 %v721, %v758
    %v775 = vadd.f32 %v722, %v759
    %v776 = vadd.f32 %v723, %v760
    %v777 = vadd.f32 %v724, %v761
    %v778 = vadd.f32 %v725, %v762
    %v779 = vadd.f32 %v726, %v763
    %v780 = vadd.f32 %v727, %v764
    %v781 = vadd.f32 %v728, %v765
    %v782 = vld [vmem:[%s729 + $0x1] sm:$0xff]
    %v783 = vld [vmem:[%s729 + $0x11] sm:$0xff]
    %v784 = vld [vmem:[%s729 + $0x21] sm:$0xff]
    %v785 = vld [vmem:[%s729 + $0x31] sm:$0xff]
    %v786 = vld [vmem:[%s729 + $0x41] sm:$0xff]
    %v787 = vld [vmem:[%s729 + $0x51] sm:$0xff]
    %v788 = vld [vmem:[%s729 + $0x61] sm:$0xff]
    %v789 = vld [vmem:[%s729 + $0x71] sm:$0xff]
    %v790 = vld [vmem:[%s729 + $0xa1] sm:$0xff]
    %v791 = vld [vmem:[%s729 + $0xb1] sm:$0xff]
    %v792 = vld [vmem:[%s729 + $0xc1] sm:$0xff]
    %v793 = vld [vmem:[%s729 + $0xd1] sm:$0xff]
    %v794 = vld [vmem:[%s729 + $0xe1] sm:$0xff]
    %v795 = vld [vmem:[%s729 + $0xf1] sm:$0xff]
    %v796 = vld [vmem:[%s729 + $0x101] sm:$0xff]
    %v797 = vld [vmem:[%s729 + $0x111] sm:$0xff]
    %v798 = vlaneseq
    %v799 = vshrl.u32 %v798, 7
    %v800 = vsub.s32 7, %v799
    %v801 = vrot.slane %v431, %v800
    %v802 = vmul.f32 %v782, %v801
    %v803 = vmul.f32 %v783, %v801
    %v804 = vmul.f32 %v784, %v801
    %v805 = vmul.f32 %v785, %v801
    %v806 = vmul.f32 %v786, %v801
    %v807 = vmul.f32 %v787, %v801
    %v808 = vmul.f32 %v788, %v801
    %v809 = vmul.f32 %v789, %v801
    %v810 = vmul.f32 %v790, %v801
    %v811 = vmul.f32 %v791, %v801
    %v812 = vmul.f32 %v792, %v801
    %v813 = vmul.f32 %v793, %v801
    %v814 = vmul.f32 %v794, %v801
    %v815 = vmul.f32 %v795, %v801
    %v816 = vmul.f32 %v796, %v801
    %v817 = vmul.f32 %v797, %v801
    %v818 = vadd.f32 %v766, %v802
    %v819 = vadd.f32 %v767, %v803
    %v820 = vadd.f32 %v768, %v804
    %v821 = vadd.f32 %v769, %v805
    %v822 = vadd.f32 %v770, %v806
    %v823 = vadd.f32 %v771, %v807
    %v824 = vadd.f32 %v772, %v808
    %v825 = vadd.f32 %v773, %v809
    %v826 = vadd.f32 %v774, %v810
    %v827 = vadd.f32 %v775, %v811
    %v828 = vadd.f32 %v776, %v812
    %v829 = vadd.f32 %v777, %v813
    %v830 = vadd.f32 %v778, %v814
    %v831 = vadd.f32 %v779, %v815
    %v832 = vadd.f32 %v780, %v816
    %v833 = vadd.f32 %v781, %v817
    %v834 = vld [vmem:[%s729 + $0x2] sm:$0xff]
    %v835 = vld [vmem:[%s729 + $0x12] sm:$0xff]
    %v836 = vld [vmem:[%s729 + $0x22] sm:$0xff]
    %v837 = vld [vmem:[%s729 + $0x32] sm:$0xff]
    %v838 = vld [vmem:[%s729 + $0x42] sm:$0xff]
    %v839 = vld [vmem:[%s729 + $0x52] sm:$0xff]
    %v840 = vld [vmem:[%s729 + $0x62] sm:$0xff]
    %v841 = vld [vmem:[%s729 + $0x72] sm:$0xff]
    %v842 = vld [vmem:[%s729 + $0xa2] sm:$0xff]
    %v843 = vld [vmem:[%s729 + $0xb2] sm:$0xff]
    %v844 = vld [vmem:[%s729 + $0xc2] sm:$0xff]
    %v845 = vld [vmem:[%s729 + $0xd2] sm:$0xff]
    %v846 = vld [vmem:[%s729 + $0xe2] sm:$0xff]
    %v847 = vld [vmem:[%s729 + $0xf2] sm:$0xff]
    %v848 = vld [vmem:[%s729 + $0x102] sm:$0xff]
    %v849 = vld [vmem:[%s729 + $0x112] sm:$0xff]
    %v850 = vlaneseq
    %v851 = vshrl.u32 %v850, 7
    %v852 = vsub.s32 0, %v851
    %v853 = vrot.slane %v432, %v852
    %v854 = vmul.f32 %v834, %v853
    %v855 = vmul.f32 %v835, %v853
    %v856 = vmul.f32 %v836, %v853
    %v857 = vmul.f32 %v837, %v853
    %v858 = vmul.f32 %v838, %v853
    %v859 = vmul.f32 %v839, %v853
    %v860 = vmul.f32 %v840, %v853
    %v861 = vmul.f32 %v841, %v853
    %v862 = vmul.f32 %v842, %v853
    %v863 = vmul.f32 %v843, %v853
    %v864 = vmul.f32 %v844, %v853
    %v865 = vmul.f32 %v845, %v853
    %v866 = vmul.f32 %v846, %v853
    %v867 = vmul.f32 %v847, %v853
    %v868 = vmul.f32 %v848, %v853
    %v869 = vmul.f32 %v849, %v853
    %v870 = vadd.f32 %v818, %v854
    %v871 = vadd.f32 %v819, %v855
    %v872 = vadd.f32 %v820, %v856
    %v873 = vadd.f32 %v821, %v857
    %v874 = vadd.f32 %v822, %v858
    %v875 = vadd.f32 %v823, %v859
    %v876 = vadd.f32 %v824, %v860
    %v877 = vadd.f32 %v825, %v861
    %v878 = vadd.f32 %v826, %v862
    %v879 = vadd.f32 %v827, %v863
    %v880 = vadd.f32 %v828, %v864
    %v881 = vadd.f32 %v829, %v865
    %v882 = vadd.f32 %v830, %v866
    %v883 = vadd.f32 %v831, %v867
    %v884 = vadd.f32 %v832, %v868
    %v885 = vadd.f32 %v833, %v869
    %v886 = vld [vmem:[#allocation6 + $0x3] sm:$0x1]
    %v887 = vlaneseq
    %v888 = vshrl.u32 %v887, 7
    %v889 = vsub.s32 0, %v888
    %v890 = vrot.slane %v886, %v889
    %v891 = vadd.f32 %v870, %v890
    %v892 = vadd.f32 %v871, %v890
    %v893 = vadd.f32 %v872, %v890
    %v894 = vadd.f32 %v873, %v890
    %v895 = vadd.f32 %v874, %v890
    %v896 = vadd.f32 %v875, %v890
    %v897 = vadd.f32 %v876, %v890
    %v898 = vadd.f32 %v877, %v890
    %v899 = vadd.f32 %v878, %v890
    %v900 = vadd.f32 %v879, %v890
    %v901 = vadd.f32 %v880, %v890
    %v902 = vadd.f32 %v881, %v890
    %v903 = vadd.f32 %v882, %v890
    %v904 = vadd.f32 %v883, %v890
    %v905 = vadd.f32 %v884, %v890
    %v906 = vadd.f32 %v885, %v890
    %v907 = vsel %vm372, %v891, 0.0
    %v908 = vsel %vm372, %v892, 0.0
    %v909 = vadd.f32 %v907, %v908
    %v910 = vsel %vm372, %v893, 0.0
    %v911 = vadd.f32 %v909, %v910
    %v912 = vsel %vm372, %v894, 0.0
    %v913 = vadd.f32 %v911, %v912
    %v914 = vsel %vm372, %v895, 0.0
    %v915 = vadd.f32 %v913, %v914
    %v916 = vsel %vm372, %v896, 0.0
    %v917 = vadd.f32 %v915, %v916
    %v918 = vsel %vm372, %v897, 0.0
    %v919 = vadd.f32 %v917, %v918
    %v920 = vsel %vm372, %v898, 0.0
    %v921 = vadd.f32 %v919, %v920
    %v922 = vrot.slane %v921, 4
    %v923 = vadd.f32 %v921, %v922
    %v924 = vrot.slane %v923, 2
    %v925 = vadd.f32 %v923, %v924
    %v926 = vrot.slane %v925, 1
    %v927 = vadd.f32 %v925, %v926
    %v928 = vsel %vm372, %v899, 0.0
    %v929 = vsel %vm372, %v900, 0.0
    %v930 = vadd.f32 %v928, %v929
    %v931 = vsel %vm372, %v901, 0.0
    %v932 = vadd.f32 %v930, %v931
    %v933 = vsel %vm372, %v902, 0.0
    %v934 = vadd.f32 %v932, %v933
    %v935 = vsel %vm372, %v903, 0.0
    %v936 = vadd.f32 %v934, %v935
    %v937 = vsel %vm372, %v904, 0.0
    %v938 = vadd.f32 %v936, %v937
    %v939 = vsel %vm372, %v905, 0.0
    %v940 = vadd.f32 %v938, %v939
    %v941 = vsel %vm372, %v906, 0.0
    %v942 = vadd.f32 %v940, %v941
    %v943 = vrot.slane %v942, 4
    %v944 = vadd.f32 %v942, %v943
    %v945 = vrot.slane %v944, 2
    %v946 = vadd.f32 %v944, %v945
    %v947 = vrot.slane %v946, 1
    %v948 = vadd.f32 %v946, %v947
    %v949 = vrcp.pop 64.0
    %v950 = vmul.f32 %v927, %v949
    %v951 = vmul.f32 %v948, %v949
    %v952 = vld [vmem:[%s7] sm:$0xff]
    %v953 = vld [vmem:[%s7 + $0x8] sm:$0xff]
    %v954 = vld [vmem:[%s7 + $0x10] sm:$0xff]
    %v955 = vld [vmem:[%s7 + $0x18] sm:$0xff]
    %v956 = vld [vmem:[%s7 + $0x20] sm:$0xff]
    %v957 = vld [vmem:[%s7 + $0x28] sm:$0xff]
    %v958 = vld [vmem:[%s7 + $0x30] sm:$0xff]
    %v959 = vld [vmem:[%s7 + $0x38] sm:$0xff]
    %v960 = vld [vmem:[#allocation8] sm:$0x1]
    %v962 = vlaneseq
    %v963 = vshrl.u32 %v962, 7
    %v964 = vsub.s32 0, %v963
    %v965 = vrot.slane %v960, %v964
    %vm969 = vcmask 1041409
    %v970 = vsel %vm969, %v951, %v950
    %v971 = vsel %vm372, %v970, 0
    %973 = vmatprep.subr.mxu0 0.0
    %974 = vmatpush1.msra.mxu0 %v952
    %975 = vmatprep.subr.mxu0 0.0
    %976 = vmatpush1.msra.mxu0 %v953
    %977 = vmatprep.subr.mxu0 0.0
    %978 = vmatpush1.msra.mxu0 %v954
    %979 = vmatprep.subr.mxu0 0.0
    %980 = vmatpush1.msra.mxu0 %v955
    %981 = vmatprep.subr.mxu0 0.0
    %982 = vmatpush1.msra.mxu0 %v956
    %983 = vmatprep.subr.mxu0 0.0
    %984 = vmatpush1.msra.mxu0 %v957
    %985 = vmatprep.subr.mxu0 0.0
    %986 = vmatpush1.msra.mxu0 %v958
    %987 = vmatprep.subr.mxu0 0.0
    %988 = vmatpush1.msra.mxu0 %v959
    %989 = vmatprep.subr.mxu0 0.0
    %990 = vmatpush1.msra.mxu0 0.0
    %991 = vmatprep.subr.mxu0 0.0
    %992 = vmatpush1.msra.mxu0 0.0
    %993 = vmatprep.subr.mxu0 0.0
    %994 = vmatpush1.msra.mxu0 0.0
    %995 = vmatprep.subr.mxu0 0.0
    %996 = vmatpush1.msra.mxu0 0.0
    %997 = vmatprep.subr.mxu0 0.0
    %998 = vmatpush1.msra.mxu0 0.0
    %999 = vmatprep.subr.mxu0 0.0
    %1000 = vmatpush1.msra.mxu0 0.0
    %1001 = vmatprep.subr.mxu0 0.0
    %1002 = vmatpush1.msra.mxu0 0.0
    %1003 = vmatprep.subr.mxu0 0.0
    %1004 = vmatpush1.msra.mxu0 0.0
    %1005 = vmatprep.subr.mxu0 0.0
    %1006 = vmatpush1.msra.mxu0 0.0
    %1007 = vmatprep.subr.mxu0 0.0
    %1008 = vmatpush1.msra.mxu0 0.0
    %1009 = vmatprep.subr.mxu0 0.0
    %1010 = vmatpush1.msra.mxu0 0.0
    %1011 = vmatprep.subr.mxu0 0.0
    %1012 = vmatpush1.msra.mxu0 0.0
    %1013 = vmatprep.subr.mxu0 0.0
    %1014 = vmatpush1.msra.mxu0 0.0
    %1015 = vmatprep.subr.mxu0 0.0
    %1016 = vmatpush1.msra.mxu0 0.0
    %1017 = vmatprep.subr.mxu0 0.0
    %1018 = vmatpush1.msra.mxu0 0.0
    %1019 = vmatprep.subr.mxu0 0.0
    %1020 = vmatpush1.msra.mxu0 0.0
    %1021 = vmatprep.subr.mxu0 0.0
    %1022 = vmatpush1.msra.mxu0 0.0
    %1023 = vmatprep.subr.mxu0 0.0
    %1024 = vmatpush1.msra.mxu0 0.0
    %1025 = vmatprep.subr.mxu0 0.0
    %1026 = vmatpush1.msra.mxu0 0.0
    %1027 = vmatprep.subr.mxu0 0.0
    %1028 = vmatpush1.msra.mxu0 0.0
    %1029 = vmatprep.subr.mxu0 0.0
    %1030 = vmatpush1.msra.mxu0 0.0
    %1031 = vmatprep.subr.mxu0 0.0
    %1032 = vmatpush1.msra.mxu0 0.0
    %1033 = vmatprep.subr.mxu0 0.0
    %1034 = vmatpush1.msra.mxu0 0.0
    %1035 = vmatprep.subr.mxu0 0.0
    %1036 = vmatpush1.msra.mxu0 0.0
    %1037 = vmatprep.mubr.f32.mxu0 0.0
    %1038 = vmatmul.mubr.f32.gmra.mrb[0].mxu0 %v971
    %v1039 = vpop.f32.mrb[0].mxu0
    %v1040 = vadd.f32 %v965, %v1039
    %v1041 = vpop.f32.mrb[0].mxu0
    %1042 = vdwg.mxu0
    %v1043 = vmax.f32 %v1040, 0.0
    %v1044 = vld [vmem:[%s8] sm:$0xff]
    %v1045 = vld [vmem:[#allocation6 + $0x4] sm:$0x1]
    %v1046 = vlaneseq
    %v1047 = vshrl.u32 %v1046, 7
    %v1048 = vsub.s32 0, %v1047
    %v1049 = vrot.slane %v1045, %v1048
    %vm1050 = vcmask 64512
    %v1052 = vsel %vm1050, %v1043, 0
    %1054 = vmatprep.subr.mxu0 0.0
    %1055 = vmatpush1.msra.mxu0 %v1044
    %1056 = vmatprep.subr.mxu0 0.0
    %1057 = vmatpush1.msra.mxu0 0.0
    %1058 = vmatprep.subr.mxu0 0.0
    %1059 = vmatpush1.msra.mxu0 0.0
    %1060 = vmatprep.subr.mxu0 0.0
    %1061 = vmatpush1.msra.mxu0 0.0
    %1062 = vmatprep.subr.mxu0 0.0
    %1063 = vmatpush1.msra.mxu0 0.0
    %1064 = vmatprep.subr.mxu0 0.0
    %1065 = vmatpush1.msra.mxu0 0.0
    %1066 = vmatprep.subr.mxu0 0.0
    %1067 = vmatpush1.msra.mxu0 0.0
    %1068 = vmatprep.subr.mxu0 0.0
    %1069 = vmatpush1.msra.mxu0 0.0
    %1070 = vmatprep.subr.mxu0 0.0
    %1071 = vmatpush1.msra.mxu0 0.0
    %1072 = vmatprep.subr.mxu0 0.0
    %1073 = vmatpush1.msra.mxu0 0.0
    %1074 = vmatprep.subr.mxu0 0.0
    %1075 = vmatpush1.msra.mxu0 0.0
    %1076 = vmatprep.subr.mxu0 0.0
    %1077 = vmatpush1.msra.mxu0 0.0
    %1078 = vmatprep.subr.mxu0 0.0
    %1079 = vmatpush1.msra.mxu0 0.0
    %1080 = vmatprep.subr.mxu0 0.0
    %1081 = vmatpush1.msra.mxu0 0.0
    %1082 = vmatprep.subr.mxu0 0.0
    %1083 = vmatpush1.msra.mxu0 0.0
    %1084 = vmatprep.subr.mxu0 0.0
    %1085 = vmatpush1.msra.mxu0 0.0
    %1086 = vmatprep.subr.mxu0 0.0
    %1087 = vmatpush1.msra.mxu0 0.0
    %1088 = vmatprep.subr.mxu0 0.0
    %1089 = vmatpush1.msra.mxu0 0.0
    %1090 = vmatprep.subr.mxu0 0.0
    %1091 = vmatpush1.msra.mxu0 0.0
    %1092 = vmatprep.subr.mxu0 0.0
    %1093 = vmatpush1.msra.mxu0 0.0
    %1094 = vmatprep.subr.mxu0 0.0
    %1095 = vmatpush1.msra.mxu0 0.0
    %1096 = vmatprep.subr.mxu0 0.0
    %1097 = vmatpush1.msra.mxu0 0.0
    %1098 = vmatprep.subr.mxu0 0.0
    %1099 = vmatpush1.msra.mxu0 0.0
    %1100 = vmatprep.subr.mxu0 0.0
    %1101 = vmatpush1.msra.mxu0 0.0
    %1102 = vmatprep.subr.mxu0 0.0
    %1103 = vmatpush1.msra.mxu0 0.0
    %1104 = vmatprep.subr.mxu0 0.0
    %1105 = vmatpush1.msra.mxu0 0.0
    %1106 = vmatprep.subr.mxu0 0.0
    %1107 = vmatpush1.msra.mxu0 0.0
    %1108 = vmatprep.subr.mxu0 0.0
    %1109 = vmatpush1.msra.mxu0 0.0
    %1110 = vmatprep.subr.mxu0 0.0
    %1111 = vmatpush1.msra.mxu0 0.0
    %1112 = vmatprep.subr.mxu0 0.0
    %1113 = vmatpush1.msra.mxu0 0.0
    %1114 = vmatprep.subr.mxu0 0.0
    %1115 = vmatpush1.msra.mxu0 0.0
    %1116 = vmatprep.subr.mxu0 0.0
    %1117 = vmatpush1.msra.mxu0 0.0
    %1118 = vmatprep.mubr.f32.mxu0 0.0
    %1119 = vmatmul.mubr.f32.gmra.mrb[0].mxu0 %v1052
    %v1120 = vpop.f32.mrb[0].mxu0
    %v1121 = vadd.f32 %v1049, %v1120
    %v1122 = vpop.f32.mrb[0].mxu0
    %1123 = vdwg.mxu0
    %v1124 = vxor.u32 %v1121, 2147483648
    %v1125 = vmul.f32 %v1124, 1.442695
    %v1126 = vpow.pop %v1125
    %v1127 = vadd.f32 %v1126, 1.0
    %v1128 = vrcp.pop %v1127
    %v1129 = vmul.f32 1.0, %v1128
    %v1132 = vunpack.c.l.s4 1966171168
    %v1133 = vunpack.c.0.s8 %v1132
    %v1134 = vlaneseq
    %v1135 = vshrl.u32 %v1134, 7
    %v1136 = vsub.s32 %v1133, %v1135
    %v1137 = vrot.slane %v1129, %v1136
    %v1138 = vcombine.high %v1137, %v1137
    %v1140 = vunpack.c.l.s4 1966171168
    %v1141 = vunpack.c.0.s8 %v1140
    %v1142 = vlaneseq
    %v1143 = vshrl.u32 %v1142, 7
    %v1144 = vsub.s32 %v1141, %v1143
    %v1145 = vrot.slane %v1137, %v1144
    %v1147 = vunpack.c.l.s4 1966171168
    %v1148 = vunpack.c.0.s8 %v1147
    %v1149 = vlaneseq
    %v1150 = vshrl.u32 %v1149, 7
    %v1151 = vsub.s32 %v1148, %v1150
    %v1152 = vrot.slane %v1138, %v1151
    %v1153 = vlaneseq
    %v1154 = vshrl.u32 %v1153, 7
    %v1155 = vsub.s32 0, %v1154
    %v1156 = vrot.slane %v1145, %v1155
    %v1157 = vlaneseq
    %v1158 = vshrl.u32 %v1157, 7
    %v1159 = vsub.s32 0, %v1158
    %v1160 = vrot.slane %v1152, %v1159
    %v1163 = vmul.f32 %v891, %v1156
    %v1164 = vmul.f32 %v892, %v1156
    %v1165 = vmul.f32 %v893, %v1156
    %v1166 = vmul.f32 %v894, %v1156
    %v1167 = vmul.f32 %v895, %v1156
    %v1168 = vmul.f32 %v896, %v1156
    %v1169 = vmul.f32 %v897, %v1156
    %v1170 = vmul.f32 %v898, %v1156
    %v1171 = vmul.f32 %v899, %v1160
    %v1172 = vmul.f32 %v900, %v1160
    %v1173 = vmul.f32 %v901, %v1160
    %v1174 = vmul.f32 %v902, %v1160
    %v1175 = vmul.f32 %v903, %v1160
    %v1176 = vmul.f32 %v904, %v1160
    %v1177 = vmul.f32 %v905, %v1160
    %v1178 = vmul.f32 %v906, %v1160
    %v1179 = vld [vmem:[#allocation6 + $0x5] sm:$0x1]
    %v1180 = vlaneseq
    %v1181 = vshrl.u32 %v1180, 7
    %v1182 = vsub.s32 0, %v1181
    %v1183 = vrot.slane %v1179, %v1182
    %v1184 = vmul.f32 %v1163, %v1183
    %v1185 = vmul.f32 %v1164, %v1183
    %v1186 = vmul.f32 %v1165, %v1183
    %v1187 = vmul.f32 %v1166, %v1183
    %v1188 = vmul.f32 %v1167, %v1183
    %v1189 = vmul.f32 %v1168, %v1183
    %v1190 = vmul.f32 %v1169, %v1183
    %v1191 = vmul.f32 %v1170, %v1183
    %v1192 = vmul.f32 %v1171, %v1183
    %v1193 = vmul.f32 %v1172, %v1183
    %v1194 = vmul.f32 %v1173, %v1183
    %v1195 = vmul.f32 %v1174, %v1183
    %v1196 = vmul.f32 %v1175, %v1183
    %v1197 = vmul.f32 %v1176, %v1183
    %v1198 = vmul.f32 %v1177, %v1183
    %v1199 = vmul.f32 %v1178, %v1183
    %v1200 = vld [vmem:[#allocation6 + $0x6] sm:$0x1]
    %v1201 = vlaneseq
    %v1202 = vshrl.u32 %v1201, 7
    %v1203 = vsub.s32 0, %v1202
    %v1204 = vrot.slane %v1200, %v1203
    %v1205 = vadd.f32 %v1184, %v1204
    %v1206 = vadd.f32 %v1185, %v1204
    %v1207 = vadd.f32 %v1186, %v1204
    %v1208 = vadd.f32 %v1187, %v1204
    %v1209 = vadd.f32 %v1188, %v1204
    %v1210 = vadd.f32 %v1189, %v1204
    %v1211 = vadd.f32 %v1190, %v1204
    %v1212 = vadd.f32 %v1191, %v1204
    %v1213 = vadd.f32 %v1192, %v1204
    %v1214 = vadd.f32 %v1193, %v1204
    %v1215 = vadd.f32 %v1194, %v1204
    %v1216 = vadd.f32 %v1195, %v1204
    %v1217 = vadd.f32 %v1196, %v1204
    %v1218 = vadd.f32 %v1197, %v1204
    %v1219 = vadd.f32 %v1198, %v1204
    %v1220 = vadd.f32 %v1199, %v1204
    %v1221 = vmax.f32 %v1205, 0.0
    %v1222 = vmax.f32 %v1206, 0.0
    %v1223 = vmax.f32 %v1207, 0.0
    %v1224 = vmax.f32 %v1208, 0.0
    %v1225 = vmax.f32 %v1209, 0.0
    %v1226 = vmax.f32 %v1210, 0.0
    %v1227 = vmax.f32 %v1211, 0.0
    %v1228 = vmax.f32 %v1212, 0.0
    %v1229 = vmax.f32 %v1213, 0.0
    %v1230 = vmax.f32 %v1214, 0.0
    %v1231 = vmax.f32 %v1215, 0.0
    %v1232 = vmax.f32 %v1216, 0.0
    %v1233 = vmax.f32 %v1217, 0.0
    %v1234 = vmax.f32 %v1218, 0.0
    %v1235 = vmax.f32 %v1219, 0.0
    %v1236 = vmax.f32 %v1220, 0.0
    %v1237 = vpack.c.bf16 %v1222, %v1221
    %v1238 = vpack.c.bf16 %v1224, %v1223
    %v1239 = vpack.c.bf16 %v1226, %v1225
    %v1240 = vpack.c.bf16 %v1228, %v1227
    %v1241 = vpack.c.bf16 %v1230, %v1229
    %v1242 = vpack.c.bf16 %v1232, %v1231
    %v1243 = vpack.c.bf16 %v1234, %v1233
    %v1244 = vpack.c.bf16 %v1236, %v1235
    %v1245 = vld [vmem:[%s9] sm:$0xf]
    %v1246 = vld [vmem:[%s9 + $0x4] sm:$0xf]
    %v1247 = vld [vmem:[%s9 + $0x8] sm:$0xf]
    %v1248 = vld [vmem:[%s9 + $0xc] sm:$0xf]
    %v1249 = vld [vmem:[%s9 + $0x10] sm:$0xf]
    %v1250 = vld [vmem:[%s9 + $0x14] sm:$0xf]
    %v1251 = vld [vmem:[%s9 + $0x18] sm:$0xf]
    %v1252 = vld [vmem:[%s9 + $0x1c] sm:$0xf]
    %v1253 = vld [vmem:[%s10] sm:$0xf]
    %v1254 = vld [vmem:[%s10 + $0x4] sm:$0xf]
    %v1255 = vld [vmem:[%s10 + $0x8] sm:$0xf]
    %v1256 = vld [vmem:[%s10 + $0xc] sm:$0xf]
    %v1261 = vunpack.c.l.b16 %v1253
    %v1262 = vunpack.c.l.b16 %v1254
    %v1263 = vunpack.c.l.b16 %v1255
    %v1264 = vunpack.c.l.b16 %v1256
    %v1265 = vpack.c.b16 %v1262, %v1261
    %v1266 = vpack.c.b16 %v1264, %v1263
    %1269 = vmatprep.subr.bf16.mxu0 0
    %1270 = vmatpush1.bf16.msra.mxu0 %v1265
    %1271 = vmatprep.subr.bf16.mxu0 0
    %1272 = vmatpush1.bf16.msra.mxu0 %v1266
    %1273 = vmatprep.subr.bf16.mxu0 0
    %1274 = vmatpush1.bf16.msra.mxu0 0
    %1275 = vmatprep.subr.bf16.mxu0 0
    %1276 = vmatpush1.bf16.msra.mxu0 0
    %1277 = vmatprep.subr.bf16.mxu0 0
    %1278 = vmatpush1.bf16.msra.mxu0 0
    %1279 = vmatprep.subr.bf16.mxu0 0
    %1280 = vmatpush1.bf16.msra.mxu0 0
    %1281 = vmatprep.subr.bf16.mxu0 0
    %1282 = vmatpush1.bf16.msra.mxu0 0
    %1283 = vmatprep.subr.bf16.mxu0 0
    %1284 = vmatpush1.bf16.msra.mxu0 0
    %1285 = vmatprep.subr.bf16.mxu0 0
    %1286 = vmatpush1.bf16.msra.mxu0 0
    %1287 = vmatprep.subr.bf16.mxu0 0
    %1288 = vmatpush1.bf16.msra.mxu0 0
    %1289 = vmatprep.subr.bf16.mxu0 0
    %1290 = vmatpush1.bf16.msra.mxu0 0
    %1291 = vmatprep.subr.bf16.mxu0 0
    %1292 = vmatpush1.bf16.msra.mxu0 0
    %1293 = vmatprep.subr.bf16.mxu0 0
    %1294 = vmatpush1.bf16.msra.mxu0 0
    %1295 = vmatprep.subr.bf16.mxu0 0
    %1296 = vmatpush1.bf16.msra.mxu0 0
    %1297 = vmatprep.subr.bf16.mxu0 0
    %1298 = vmatpush1.bf16.msra.mxu0 0
    %1299 = vmatprep.subr.bf16.mxu0 0
    %1300 = vmatpush1.bf16.msra.mxu0 0
    %1301 = vmatprep.mubr.bf16.mxu0 0
    %1302 = vmatmul.mubr.bf16.gmra.mrb[0].mxu0 %v194
    %v1303 = vpop.f32.mrb[0].mxu0
    %v1304 = vadd.f32 0.0, %v1303
    %v1305 = vpop.f32.mrb[0].mxu0
    %v1306 = vpop.f32.mrb[0].mxu0
    %v1307 = vadd.f32 0.0, %v1306
    %v1308 = vpop.f32.mrb[0].mxu0
    %1309 = vmatprep.mubr.bf16.mxu0 0
    %1310 = vmatmul.mubr.bf16.gmra.mrb[0].mxu0 %v197
    %v1311 = vpop.f32.mrb[0].mxu0
    %v1312 = vadd.f32 0.0, %v1311
    %v1313 = vpop.f32.mrb[0].mxu0
    %v1314 = vpop.f32.mrb[0].mxu0
    %v1315 = vadd.f32 0.0, %v1314
    %v1316 = vpop.f32.mrb[0].mxu0
    %1317 = vmatprep.mubr.bf16.mxu0 0
    %1318 = vmatmul.mubr.bf16.gmra.mrb[0].mxu0 %v200
    %v1319 = vpop.f32.mrb[0].mxu0
    %v1320 = vadd.f32 0.0, %v1319
    %v1321 = vpop.f32.mrb[0].mxu0
    %v1322 = vpop.f32.mrb[0].mxu0
    %v1323 = vadd.f32 0.0, %v1322
    %v1324 = vpop.f32.mrb[0].mxu0
    %1325 = vmatprep.mubr.bf16.mxu0 0
    %1326 = vmatmul.mubr.bf16.gmra.mrb[0].mxu0 %v203
    %v1327 = vpop.f32.mrb[0].mxu0
    %v1328 = vadd.f32 0.0, %v1327
    %v1329 = vpop.f32.mrb[0].mxu0
    %v1330 = vpop.f32.mrb[0].mxu0
    %v1331 = vadd.f32 0.0, %v1330
    %v1332 = vpop.f32.mrb[0].mxu0
    %1333 = vmatprep.mubr.bf16.mxu0 0
    %1334 = vmatmul.mubr.bf16.gmra.mrb[0].mxu0 %v206
    %v1335 = vpop.f32.mrb[0].mxu0
    %v1336 = vadd.f32 0.0, %v1335
    %v1337 = vpop.f32.mrb[0].mxu0
    %v1338 = vpop.f32.mrb[0].mxu0
    %v1339 = vadd.f32 0.0, %v1338
    %v1340 = vpop.f32.mrb[0].mxu0
    %1341 = vmatprep.mubr.bf16.mxu0 0
    %1342 = vmatmul.mubr.bf16.gmra.mrb[0].mxu0 %v209
    %v1343 = vpop.f32.mrb[0].mxu0
    %v1344 = vadd.f32 0.0, %v1343
    %v1345 = vpop.f32.mrb[0].mxu0
    %v1346 = vpop.f32.mrb[0].mxu0
    %v1347 = vadd.f32 0.0, %v1346
    %v1348 = vpop.f32.mrb[0].mxu0
    %1349 = vmatprep.mubr.bf16.mxu0 0
    %1350 = vmatmul.mubr.bf16.gmra.mrb[0].mxu0 %v212
    %v1351 = vpop.f32.mrb[0].mxu0
    %v1352 = vadd.f32 0.0, %v1351
    %v1353 = vpop.f32.mrb[0].mxu0
    %v1354 = vpop.f32.mrb[0].mxu0
    %v1355 = vadd.f32 0.0, %v1354
    %v1356 = vpop.f32.mrb[0].mxu0
    %1357 = vmatprep.mubr.bf16.mxu0 0
    %1358 = vmatmul.mubr.bf16.gmra.mrb[0].mxu0 %v215
    %v1359 = vpop.f32.mrb[0].mxu0
    %v1360 = vadd.f32 0.0, %v1359
    %v1361 = vpop.f32.mrb[0].mxu0
    %v1362 = vpop.f32.mrb[0].mxu0
    %v1363 = vadd.f32 0.0, %v1362
    %v1364 = vpop.f32.mrb[0].mxu0
    %1365 = vdwg.mxu0
    %v1374 = vunpack.c.l.b16 %v1245
    %v1375 = vunpack.c.l.b16 %v1246
    %v1376 = vunpack.c.l.b16 %v1247
    %v1377 = vunpack.c.l.b16 %v1248
    %v1378 = vunpack.c.l.b16 %v1249
    %v1379 = vunpack.c.l.b16 %v1250
    %v1380 = vunpack.c.l.b16 %v1251
    %v1381 = vunpack.c.l.b16 %v1252
    %v1382 = vpack.c.b16 %v1375, %v1374
    %v1383 = vpack.c.b16 %v1377, %v1376
    %v1384 = vpack.c.b16 %v1379, %v1378
    %v1385 = vpack.c.b16 %v1381, %v1380
    %v1391 = vsel %vm372, %v1237, 0
    %v1394 = vsel %vm372, %v1238, 0
    %v1397 = vsel %vm372, %v1239, 0
    %v1400 = vsel %vm372, %v1240, 0
    %v1403 = vsel %vm372, %v1241, 0
    %v1406 = vsel %vm372, %v1242, 0
    %v1409 = vsel %vm372, %v1243, 0
    %v1412 = vsel %vm372, %v1244, 0
    %1414 = vmatprep.subr.bf16.mxu0 0
    %1415 = vmatpush1.bf16.msra.mxu0 %v1382
    %1416 = vmatprep.subr.bf16.mxu0 0
    %1417 = vmatpush1.bf16.msra.mxu0 %v1383
    %1418 = vmatprep.subr.bf16.mxu0 0
    %1419 = vmatpush1.bf16.msra.mxu0 %v1384
    %1420 = vmatprep.subr.bf16.mxu0 0
    %1421 = vmatpush1.bf16.msra.mxu0 %v1385
    %1422 = vmatprep.subr.bf16.mxu0 0
    %1423 = vmatpush1.bf16.msra.mxu0 0
    %1424 = vmatprep.subr.bf16.mxu0 0
    %1425 = vmatpush1.bf16.msra.mxu0 0
    %1426 = vmatprep.subr.bf16.mxu0 0
    %1427 = vmatpush1.bf16.msra.mxu0 0
    %1428 = vmatprep.subr.bf16.mxu0 0
    %1429 = vmatpush1.bf16.msra.mxu0 0
    %1430 = vmatprep.subr.bf16.mxu0 0
    %1431 = vmatpush1.bf16.msra.mxu0 0
    %1432 = vmatprep.subr.bf16.mxu0 0
    %1433 = vmatpush1.bf16.msra.mxu0 0
    %1434 = vmatprep.subr.bf16.mxu0 0
    %1435 = vmatpush1.bf16.msra.mxu0 0
    %1436 = vmatprep.subr.bf16.mxu0 0
    %1437 = vmatpush1.bf16.msra.mxu0 0
    %1438 = vmatprep.subr.bf16.mxu0 0
    %1439 = vmatpush1.bf16.msra.mxu0 0
    %1440 = vmatprep.subr.bf16.mxu0 0
    %1441 = vmatpush1.bf16.msra.mxu0 0
    %1442 = vmatprep.subr.bf16.mxu0 0
    %1443 = vmatpush1.bf16.msra.mxu0 0
    %1444 = vmatprep.subr.bf16.mxu0 0
    %1445 = vmatpush1.bf16.msra.mxu0 0
    %1446 = vmatprep.mubr.bf16.mxu0 0
    %1447 = vmatmul.mubr.bf16.gmra.mrb[0].mxu0 %v1391
    %v1448 = vpop.f32.mrb[0].mxu0
    %v1449 = vadd.f32 %v1304, %v1448
    %v1450 = vpop.f32.mrb[0].mxu0
    %v1451 = vpop.f32.mrb[0].mxu0
    %v1452 = vadd.f32 %v1307, %v1451
    %v1453 = vpop.f32.mrb[0].mxu0
    %1454 = vmatprep.mubr.bf16.mxu0 0
    %1455 = vmatmul.mubr.bf16.gmra.mrb[0].mxu0 %v1394
    %v1456 = vpop.f32.mrb[0].mxu0
    %v1457 = vadd.f32 %v1312, %v1456
    %v1458 = vpop.f32.mrb[0].mxu0
    %v1459 = vpop.f32.mrb[0].mxu0
    %v1460 = vadd.f32 %v1315, %v1459
    %v1461 = vpop.f32.mrb[0].mxu0
    %1462 = vmatprep.mubr.bf16.mxu0 0
    %1463 = vmatmul.mubr.bf16.gmra.mrb[0].mxu0 %v1397
    %v1464 = vpop.f32.mrb[0].mxu0
    %v1465 = vadd.f32 %v1320, %v1464
    %v1466 = vpop.f32.mrb[0].mxu0
    %v1467 = vpop.f32.mrb[0].mxu0
    %v1468 = vadd.f32 %v1323, %v1467
    %v1469 = vpop.f32.mrb[0].mxu0
    %1470 = vmatprep.mubr.bf16.mxu0 0
    %1471 = vmatmul.mubr.bf16.gmra.mrb[0].mxu0 %v1400
    %v1472 = vpop.f32.mrb[0].mxu0
    %v1473 = vadd.f32 %v1328, %v1472
    %v1474 = vpop.f32.mrb[0].mxu0
    %v1475 = vpop.f32.mrb[0].mxu0
    %v1476 = vadd.f32 %v1331, %v1475
    %v1477 = vpop.f32.mrb[0].mxu0
    %1478 = vmatprep.mubr.bf16.mxu0 0
    %1479 = vmatmul.mubr.bf16.gmra.mrb[0].mxu0 %v1403
    %v1480 = vpop.f32.mrb[0].mxu0
    %v1481 = vadd.f32 %v1336, %v1480
    %v1482 = vpop.f32.mrb[0].mxu0
    %v1483 = vpop.f32.mrb[0].mxu0
    %v1484 = vadd.f32 %v1339, %v1483
    %v1485 = vpop.f32.mrb[0].mxu0
    %1486 = vmatprep.mubr.bf16.mxu0 0
    %1487 = vmatmul.mubr.bf16.gmra.mrb[0].mxu0 %v1406
    %v1488 = vpop.f32.mrb[0].mxu0
    %v1489 = vadd.f32 %v1344, %v1488
    %v1490 = vpop.f32.mrb[0].mxu0
    %v1491 = vpop.f32.mrb[0].mxu0
    %v1492 = vadd.f32 %v1347, %v1491
    %v1493 = vpop.f32.mrb[0].mxu0
    %1494 = vmatprep.mubr.bf16.mxu0 0
    %1495 = vmatmul.mubr.bf16.gmra.mrb[0].mxu0 %v1409
    %v1496 = vpop.f32.mrb[0].mxu0
    %v1497 = vadd.f32 %v1352, %v1496
    %v1498 = vpop.f32.mrb[0].mxu0
    %v1499 = vpop.f32.mrb[0].mxu0
    %v1500 = vadd.f32 %v1355, %v1499
    %v1501 = vpop.f32.mrb[0].mxu0
    %1502 = vmatprep.mubr.bf16.mxu0 0
    %1503 = vmatmul.mubr.bf16.gmra.mrb[0].mxu0 %v1412
    %v1504 = vpop.f32.mrb[0].mxu0
    %v1505 = vadd.f32 %v1360, %v1504
    %v1506 = vpop.f32.mrb[0].mxu0
    %v1507 = vpop.f32.mrb[0].mxu0
    %v1508 = vadd.f32 %v1363, %v1507
    %v1509 = vpop.f32.mrb[0].mxu0
    %1510 = vdwg.mxu0
    %v1511 = vld [vmem:[#allocation9] sm:$0x1]
    %v1513 = vlaneseq
    %v1514 = vshrl.u32 %v1513, 7
    %v1515 = vsub.s32 0, %v1514
    %v1516 = vrot.slane %v1511, %v1515
    %v1518 = vadd.f32 %v1449, %v1516
    %v1519 = vadd.f32 %v1452, %v1516
    %v1520 = vadd.f32 %v1457, %v1516
    %v1521 = vadd.f32 %v1460, %v1516
    %v1522 = vadd.f32 %v1465, %v1516
    %v1523 = vadd.f32 %v1468, %v1516
    %v1524 = vadd.f32 %v1473, %v1516
    %v1525 = vadd.f32 %v1476, %v1516
    %v1526 = vadd.f32 %v1481, %v1516
    %v1527 = vadd.f32 %v1484, %v1516
    %v1528 = vadd.f32 %v1489, %v1516
    %v1529 = vadd.f32 %v1492, %v1516
    %v1530 = vadd.f32 %v1497, %v1516
    %v1531 = vadd.f32 %v1500, %v1516
    %v1532 = vadd.f32 %v1505, %v1516
    %v1533 = vadd.f32 %v1508, %v1516
    %1534 = vst.msk [vmem:[#allocation11] sm:$0xff] %vm372, %v1518
    %1535 = vst.msk [vmem:[#allocation11 + $0x8] sm:$0xff] %vm372, %v1519
    %1536 = vst.msk [vmem:[#allocation11 + $0x10] sm:$0xff] %vm372, %v1520
    %1537 = vst.msk [vmem:[#allocation11 + $0x18] sm:$0xff] %vm372, %v1521
    %1538 = vst.msk [vmem:[#allocation11 + $0x20] sm:$0xff] %vm372, %v1522
    %1539 = vst.msk [vmem:[#allocation11 + $0x28] sm:$0xff] %vm372, %v1523
    %1540 = vst.msk [vmem:[#allocation11 + $0x30] sm:$0xff] %vm372, %v1524
    %1541 = vst.msk [vmem:[#allocation11 + $0x38] sm:$0xff] %vm372, %v1525
    %1542 = vst.msk [vmem:[#allocation11 + $0x40] sm:$0xff] %vm372, %v1526
    %1543 = vst.msk [vmem:[#allocation11 + $0x48] sm:$0xff] %vm372, %v1527
    %1544 = vst.msk [vmem:[#allocation11 + $0x50] sm:$0xff] %vm372, %v1528
    %1545 = vst.msk [vmem:[#allocation11 + $0x58] sm:$0xff] %vm372, %v1529
    %1546 = vst.msk [vmem:[#allocation11 + $0x60] sm:$0xff] %vm372, %v1530
    %1547 = vst.msk [vmem:[#allocation11 + $0x68] sm:$0xff] %vm372, %v1531
    %1548 = vst.msk [vmem:[#allocation11 + $0x70] sm:$0xff] %vm372, %v1532
    %1549 = vst.msk [vmem:[#allocation11 + $0x78] sm:$0xff] %vm372, %v1533
    // Predicated region
    $region62: #{tpu_custom_call.1} parent=1 // pred_check
      _
    $region63: #{tpu_custom_call.1} parent=1 // pred_check_branch
      %1551 = sbr.rel (0) target = $region65
    $region64: #{tpu_custom_call.1} parent=1 // pred_region
      %s1553 = ssub.s32 2048, 2048
      %1554 = vsyncadd [#allocation5], %s1553
      %s1555 = sshll.u32 [#allocation11], 4
      %s1556 = int_to_ptr.vmem [resolvable:$true] %s1555
      %1561 = dma.vmem_to_hbm [thread:$0]  %s1556, 2048, %s11, [#allocation5], 128, 128, 8
    $region65: #{tpu_custom_call.1} parent=1 // pred_fallthru
      _
    // Predicated region
    $region66: #{tpu_custom_call.1} parent=1 // pred_check
      _
    $region67: #{tpu_custom_call.1} parent=1 // pred_check_branch
      %1563 = sbr.rel (0) target = $region69
    $region68: #{tpu_custom_call.1} parent=1 // pred_region
      %1564 = dma.done [#allocation5], 2048
    $region69: #{tpu_custom_call.1} parent=1 // pred_fallthru
      _
    %1565 = vsyncpa [#allocation4], 1
    %1566 = vsyncpa [#allocation7], 1
    %1567 = vsyncpa [#allocation10], 1
    %1568 = vsyncpa [#allocation5], 1

</llo_original>
